<compile_context>
chip_gen: v7x
topology: tpu7x:2x2x1
jax: 0.10.0
libtpu: 0.0.40
codegen_flags: <defaults>
</compile_context>

<pallas_src>
import functools

import jax
import jax.numpy as jnp
from jax import lax
from jax.experimental import pallas as pl
from jax.experimental.pallas import tpu as pltpu

EPS = 1e-5
_INV_SQRT2 = 0.7071067811865476
_SQRT_2_OVER_PI = 0.7978845608028654


def _layernorm(v, gamma, beta):
    mu = jnp.mean(v, axis=-1, keepdims=True)
    var = jnp.mean((v - mu) ** 2, axis=-1, keepdims=True)
    return (v - mu) * lax.rsqrt(var + EPS) * gamma + beta


def transformer_block_kernel(
    xq_ref,   # (1, TQ, H)  f32 query-row tile of x
    xf_ref,   # (1, S, H)   bf16 full sequence for this batch (keys/values)
    w1_ref,   # (H, T4)     bf16 chunk of W1
    b1_ref,   # (1, T4)     f32 chunk of b1
    w2_ref,   # (T4, H)     bf16 chunk of W2
    p_ref,    # (5, H)      f32 packed: [b2, g1, be1, g2, be2]
    o_ref,    # (1, TQ, H)
    yb_sc,    # VMEM (TQ, H) bf16 : LayerNorm1 output (FFN input), written once
    acc_sc,   # VMEM (TQ, H) f32  : y + b2 + FFN accumulation over 4H chunks
    *,
    exact_gelu,
):
    k = pl.program_id(2)

    @pl.when(k == 0)
    def _attention_ln1_and_seed():
        p = p_ref[...]                                       # (5, H) f32
        xq = xq_ref[0]                                       # (TQ, H) f32
        xq_b = xq.astype(jnp.bfloat16)
        xf_b = xf_ref[0]                                     # (S, H) bf16
        # scores = xq @ xf^T as a last-dim contraction (no XLU transpose), MXU/f32 acc.
        scores = lax.dot_general(
            xq_b, xf_b,
            dimension_numbers=(((1,), (1,)), ((), ())),
            preferred_element_type=jnp.float32)              # (TQ, S)
        m = jnp.max(scores, axis=-1, keepdims=True)
        e = jnp.exp(scores - m)
        attn = e * pl.reciprocal(jnp.sum(e, axis=-1, keepdims=True), approx=True)
        attended = jnp.dot(attn.astype(jnp.bfloat16), xf_b,
                           preferred_element_type=jnp.float32)   # (TQ, H)
        y = _layernorm(xq + attended, p[1:2], p[2:3])            # f32 (TQ, H)
        yb_sc[...] = y.astype(jnp.bfloat16)
        # Seed the accumulator with the LayerNorm2 residual + b2: the epilogue
        # becomes a bare LayerNorm2 (no zero store, no extra adds).
        acc_sc[...] = y + p[0:1]

    # --- FFN chunk: h_k = GELU(y @ W1[:, k] + b1[k]) ; acc += h_k @ W2[k, :] ---
    h = jnp.dot(yb_sc[...], w1_ref[...], preferred_element_type=jnp.float32)
    h = h + b1_ref[...]
    if exact_gelu:
        # Exact-erf GELU: bit-closest to nn.GELU() default (VALU polynomial).
        h = 0.5 * h * (1.0 + lax.erf(h * jnp.float32(_INV_SQRT2)))
    else:
        # tanh-approx GELU: transcendental goes to the EUP (free slot on v6e/v7x).
        u = jnp.float32(_SQRT_2_OVER_PI) * (h + jnp.float32(0.044715) * (h * h * h))
        h = 0.5 * h * (1.0 + jnp.tanh(u))
    acc_sc[...] += jnp.dot(h.astype(jnp.bfloat16), w2_ref[...],
                           preferred_element_type=jnp.float32)

    @pl.when(k == pl.num_programs(2) - 1)
    def _ln2_and_store():
        p = p_ref[...]
        o_ref[0] = _layernorm(acc_sc[...], p[3:4], p[4:5]).astype(o_ref.dtype)


def _pick_tile(total, target, multiple):
    """Largest divisor of `total` that is <= target and a multiple of `multiple`."""
    if total <= target:
        return total
    t = (target // multiple) * multiple
    while t >= multiple:
        if total % t == 0:
            return t
        t -= multiple
    return total


def _vmem_limit_bytes():
    cap = 128 * 1024 * 1024
    try:
        get_info = getattr(pltpu, "get_tpu_info", None)
        if get_info is not None:
            cap = int(get_info().vmem_capacity_bytes)
    except Exception:
        pass
    # ~70% of physical, capped: ≈45 MiB on v7x (64 MiB/TC), 80 MiB on v5e/v6e (128 MiB).
    return int(min(cap * 7 // 10, 80 * 1024 * 1024))


def _spec(shape, index_map, single_buffered=False):
    """BlockSpec, optionally single-buffered (block index rarely/never changes)."""
    if single_buffered and hasattr(pl, "Buffered"):
        try:
            return pl.BlockSpec(shape, index_map, pipeline_mode=pl.Buffered(1))
        except Exception:
            pass
    return pl.BlockSpec(shape, index_map)


@functools.partial(jax.jit, static_argnames=("tile_q", "tile_h4", "exact_gelu"))
def transformer_block(x, w1, b1, w2, b2, g1, be1, g2, be2,
                      tile_q=None, tile_h4=None, exact_gelu=False):
    B, S, H = x.shape
    H4 = w1.shape[1]
    assert w1.shape == (H, H4) and w2.shape == (H4, H)

    vmem_limit = _vmem_limit_bytes()

    if tile_q is None:
        # Bigger query tiles amortize per-step overhead and weight re-streaming.
        tile_q = _pick_tile(S, 512, 8)
        # v7x has 2 TensorCores: keep >= 2 parallel programs when B == 1.
        if B == 1 and S // tile_q < 2 and S >= 16:
            tile_q = _pick_tile(S, max(8, S // 2), 8)
    if tile_h4 is None:
        weight_bytes = 2 * H * H4 * 2                      # W1 + W2 in bf16
        if weight_bytes <= (vmem_limit * 2) // 5:
            tile_h4 = H4                                   # weights fully resident
        else:
            mult = 256 if H4 % 256 == 0 else 128           # v6e/v7x MXU is 2x256x256
            tile_h4 = _pick_tile(H4, 512, mult)
    assert S % tile_q == 0 and H4 % tile_h4 == 0
    n_q = S // tile_q
    n_k4 = H4 // tile_h4
    weights_resident = (n_k4 == 1)

    # bf16 K/V and weights: halves the dominant HBM->VMEM traffic / VMEM residency;
    # all matmuls still accumulate in f32 on the MXU.
    x_kv = x.astype(jnp.bfloat16)
    w1_b = w1.astype(jnp.bfloat16)
    w2_b = w2.astype(jnp.bfloat16)
    b1_2d = b1.reshape(1, H4).astype(jnp.float32)
    # Pack the five H-sized vectors into one buffer (one DMA / one padded VMEM tile).
    params = jnp.stack([b2, g1, be1, g2, be2], axis=0).astype(jnp.float32)

    kernel = pl.pallas_call(
        functools.partial(transformer_block_kernel, exact_gelu=exact_gelu),
        out_shape=jax.ShapeDtypeStruct((B, S, H), x.dtype),
        grid=(B, n_q, n_k4),   # k (4H chunks) MUST stay innermost + "arbitrary"
        in_specs=[
            pl.BlockSpec((1, tile_q, H), lambda b, i, k: (b, i, 0)),   # f32 query tile
            _spec((1, S, H), lambda b, i, k: (b, 0, 0),
                  single_buffered=True),                               # bf16 K/V block
            _spec((H, tile_h4), lambda b, i, k: (0, k),
                  single_buffered=weights_resident),                   # W1 chunk
            pl.BlockSpec((1, tile_h4), lambda b, i, k: (0, k)),        # b1 chunk
            _spec((tile_h4, H), lambda b, i, k: (k, 0),
                  single_buffered=weights_resident),                   # W2 chunk
            pl.BlockSpec((5, H), lambda b, i, k: (0, 0)),              # packed vectors
        ],
        out_specs=pl.BlockSpec((1, tile_q, H), lambda b, i, k: (b, i, 0)),
        scratch_shapes=[
            pltpu.VMEM((tile_q, H), jnp.bfloat16),   # y (LN1 output, FFN input)
            pltpu.VMEM((tile_q, H), jnp.float32),    # y + b2 + FFN accumulator
        ],
        compiler_params=pltpu.CompilerParams(
            dimension_semantics=("parallel", "parallel", "arbitrary"),
            vmem_limit_bytes=vmem_limit,
        ),
    )
    return kernel(x, x_kv, w1_b, b1_2d, w2_b, params)


def reference(x, w1, b1, w2, b2, g1, be1, g2, be2):
    def ln(v, g, b):
        mu = jnp.mean(v, axis=-1, keepdims=True)
        var = jnp.mean((v - mu) ** 2, axis=-1, keepdims=True)
        return (v - mu) / jnp.sqrt(var + EPS) * g + b

    scores = jnp.einsum("bsh,bth->bst", x, x)
    attn = jax.nn.softmax(scores, axis=-1)
    attended = jnp.einsum("bst,bth->bsh", attn, x)
    y = ln(x + attended, g1, be1)
    h = y @ w1 + b1
    h = jax.nn.gelu(h, approximate=False)
    f = h @ w2 + b2
    return ln(y + f, g2, be2)


if __name__ == "__main__":
    # Small but TPU-friendly shapes: H = 128 keeps the output lane-dense and the
    # MXU fully fed (the H < 128 toy path is left as a TODO above).
    B, S, H = 2, 32, 128
    H4 = 4 * H

    key = jax.random.PRNGKey(0)
    kx, k1, k2, k3, k4 = jax.random.split(key, 5)

    x = jax.random.normal(kx, (B, S, H), dtype=jnp.float32)
    # Shapes match nn.Linear(H, 4H), nn.Linear(4H, H), two nn.LayerNorm(H).
    w1 = jax.random.normal(k1, (H, H4), dtype=jnp.float32) * (1.0 / jnp.sqrt(H))
    b1 = jax.random.normal(k2, (H4,), dtype=jnp.float32) * 0.01
    w2 = jax.random.normal(k3, (H4, H), dtype=jnp.float32) * (1.0 / jnp.sqrt(H4))
    b2 = jax.random.normal(k4, (H,), dtype=jnp.float32) * 0.01
    g1 = jnp.ones((H,), jnp.float32)
    be1 = jnp.zeros((H,), jnp.float32)
    g2 = jnp.ones((H,), jnp.float32)
    be2 = jnp.zeros((H,), jnp.float32)

    ref = reference(x, w1, b1, w2, b2, g1, be1, g2, be2)

    # Path 1: default tiling -> weights fully resident (grid k = 1), exact-erf GELU.
    out_resident = transformer_block(x, w1, b1, w2, b2, g1, be1, g2, be2,
                                     exact_gelu=True)
    out_resident = jax.block_until_ready(out_resident)
    err1 = float(jnp.max(jnp.abs(out_resident - ref)))
    # bf16 MXU operands (f32 acc) + approx softmax reciprocal vs. a pure f32
    # reference => relaxed tolerance.
    assert jnp.allclose(out_resident, ref, atol=5e-2, rtol=5e-2), err1

    # Path 2: explicit query / 4H tiling (grid (2, 2, 4)) -> exercises the streamed
    # FFN-weight path, the carried VMEM scratch across k, and the tanh-approx GELU.
    out_tiled = transformer_block(x, w1, b1, w2, b2, g1, be1, g2, be2,
                                  tile_q=16, tile_h4=128, exact_gelu=False)
    out_tiled = jax.block_until_ready(out_tiled)
    err2 = float(jnp.max(jnp.abs(out_tiled - ref)))
    assert jnp.allclose(out_tiled, ref, atol=5e-2, rtol=5e-2), err2

    print("KERNEL_OK")
</pallas_src>

<mosaic_0001>
module attributes {stable_mosaic.version = 11 : i64} {
  func.func @transformer_block_kernel(%arg0: i32, %arg1: i32, %arg2: i32, %arg3: memref<1x32x128xf32, #tpu.memory_space<vmem>>, %arg4: memref<1x32x128xbf16, #tpu.memory_space<vmem>>, %arg5: memref<128x512xbf16, #tpu.memory_space<vmem>>, %arg6: memref<1x512xf32, #tpu.memory_space<vmem>>, %arg7: memref<512x128xbf16, #tpu.memory_space<vmem>>, %arg8: memref<5x128xf32, #tpu.memory_space<vmem>>, %arg9: memref<1x32x128xf32, #tpu.memory_space<vmem>>, %arg10: memref<32x128xbf16, #tpu.memory_space<vmem>>, %arg11: memref<32x128xf32, #tpu.memory_space<vmem>>) attributes {dimension_semantics = [#tpu.dimension_semantics<parallel>, #tpu.dimension_semantics<parallel>, #tpu.dimension_semantics<arbitrary>], iteration_bounds = array<i64: 2, 1, 1>, scalar_prefetch = 0 : i64, scratch_operands = 2 : i64, tpu.core_type = #tpu.core_type<tc>, window_params = [{transform_indices = @transform_0, window_bounds = array<i64: 1, 32, 128>}, {pipeline_mode = #tpu.pipeline_mode<synchronous>, transform_indices = @transform_1, window_bounds = array<i64: 1, 32, 128>}, {pipeline_mode = #tpu.pipeline_mode<synchronous>, transform_indices = @transform_2, window_bounds = array<i64: 128, 512>}, {transform_indices = @transform_3, window_bounds = array<i64: 1, 512>}, {pipeline_mode = #tpu.pipeline_mode<synchronous>, transform_indices = @transform_4, window_bounds = array<i64: 512, 128>}, {pipeline_mode = #tpu.pipeline_mode<synchronous>, transform_indices = @transform_5, window_bounds = array<i64: 5, 128>}, {transform_indices = @transform_6, window_bounds = array<i64: 1, 32, 128>}]} {
    %c0_i32 = arith.constant 0 : i32
    %0 = arith.cmpi eq, %arg2, %c0_i32 : i32
    %1 = arith.extui %0 : i1 to i32
    %c0_i32_0 = arith.constant 0 : i32
    %2 = arith.cmpi ne, %1, %c0_i32_0 : i32
    scf.if %2 {
      %c0_18 = arith.constant 0 : index
      %c0_19 = arith.constant 0 : index
      %26 = vector.load %arg8[%c0_18, %c0_19] : memref<5x128xf32, #tpu.memory_space<vmem>>, vector<5x128xf32>
      %c0_20 = arith.constant 0 : index
      %c0_21 = arith.constant 0 : index
      %c0_22 = arith.constant 0 : index
      %27 = vector.load %arg3[%c0_20, %c0_21, %c0_22] : memref<1x32x128xf32, #tpu.memory_space<vmem>>, vector<1x32x128xf32>
      %28 = vector.shape_cast %27 : vector<1x32x128xf32> to vector<32x128xf32>
      %29 = arith.truncf %28 : vector<32x128xf32> to vector<32x128xbf16>
      %c0_23 = arith.constant 0 : index
      %c0_24 = arith.constant 0 : index
      %c0_25 = arith.constant 0 : index
      %30 = vector.load %arg4[%c0_23, %c0_24, %c0_25] : memref<1x32x128xbf16, #tpu.memory_space<vmem>>, vector<1x32x128xbf16>
      %31 = vector.shape_cast %30 : vector<1x32x128xbf16> to vector<32x128xbf16>
      %cst_26 = arith.constant dense<0.000000e+00> : vector<32x32xf32>
      %32 = tpu.matmul %29, %31, %cst_26 {dimension_numbers = #tpu.dot_dimension_numbers<[1], [1], [0], [0], [0, 0, 1, 0], [], []>} : vector<32x128xbf16>, vector<32x128xbf16>, vector<32x32xf32> -> vector<32x32xf32>
      %cst_27 = arith.constant dense<0xFF800000> : vector<32xf32>
      %33 = vector.multi_reduction <maximumf>, %32, %cst_27 [1] : vector<32x32xf32> to vector<32xf32>
      %34 = vector.shape_cast %33 : vector<32xf32> to vector<32x1xf32>
      %35 = vector.broadcast %34 : vector<32x1xf32> to vector<32x32xf32>
      %36 = arith.subf %32, %35 : vector<32x32xf32>
      %37 = math.exp %36 : vector<32x32xf32>
      %cst_28 = arith.constant dense<0.000000e+00> : vector<32xf32>
      %38 = vector.multi_reduction <add>, %37, %cst_28 [1] : vector<32x32xf32> to vector<32xf32>
      %39 = vector.shape_cast %38 : vector<32xf32> to vector<32x1xf32>
      %40 = tpu.reciprocal %39 {approx = true} : vector<32x1xf32> -> vector<32x1xf32>
      %41 = vector.broadcast %40 : vector<32x1xf32> to vector<32x32xf32>
      %42 = arith.mulf %37, %41 : vector<32x32xf32>
      %43 = arith.truncf %42 : vector<32x32xf32> to vector<32x32xbf16>
      %cst_29 = arith.constant dense<0.000000e+00> : vector<32x128xf32>
      %44 = tpu.matmul %43, %31, %cst_29 {dimension_numbers = #tpu.dot_dimension_numbers<[1], [0], [0], [1], [0, 0, 1, 1], [], []>} : vector<32x32xbf16>, vector<32x128xbf16>, vector<32x128xf32> -> vector<32x128xf32>
      %45 = arith.addf %28, %44 : vector<32x128xf32>
      %46 = vector.extract_strided_slice %26 {offsets = [1, 0], sizes = [1, 128], strides = [1, 1]} : vector<5x128xf32> to vector<1x128xf32>
      %47 = vector.extract_strided_slice %26 {offsets = [2, 0], sizes = [1, 128], strides = [1, 1]} : vector<5x128xf32> to vector<1x128xf32>
      %cst_30 = arith.constant dense<0.000000e+00> : vector<32xf32>
      %48 = vector.multi_reduction <add>, %45, %cst_30 [1] : vector<32x128xf32> to vector<32xf32>
      %49 = vector.shape_cast %48 : vector<32xf32> to vector<32x1xf32>
      %cst_31 = arith.constant 1.280000e+02 : f32
      %50 = vector.broadcast %cst_31 : f32 to vector<32x1xf32>
      %51 = arith.divf %49, %50 : vector<32x1xf32>
      %52 = vector.broadcast %51 : vector<32x1xf32> to vector<32x128xf32>
      %53 = arith.subf %45, %52 : vector<32x128xf32>
      %54 = arith.mulf %53, %53 : vector<32x128xf32>
      %cst_32 = arith.constant dense<0.000000e+00> : vector<32xf32>
      %55 = vector.multi_reduction <add>, %54, %cst_32 [1] : vector<32x128xf32> to vector<32xf32>
      %56 = vector.shape_cast %55 : vector<32xf32> to vector<32x1xf32>
      %cst_33 = arith.constant 1.280000e+02 : f32
      %57 = vector.broadcast %cst_33 : f32 to vector<32x1xf32>
      %58 = arith.divf %56, %57 : vector<32x1xf32>
      %59 = vector.broadcast %51 : vector<32x1xf32> to vector<32x128xf32>
      %60 = arith.subf %45, %59 : vector<32x128xf32>
      %cst_34 = arith.constant 9.99999974E-6 : f32
      %61 = vector.broadcast %cst_34 : f32 to vector<32x1xf32>
      %62 = arith.addf %58, %61 : vector<32x1xf32>
      %63 = math.rsqrt %62 : vector<32x1xf32>
      %64 = vector.broadcast %63 : vector<32x1xf32> to vector<32x128xf32>
      %65 = arith.mulf %60, %64 : vector<32x128xf32>
      %66 = vector.broadcast %46 : vector<1x128xf32> to vector<32x128xf32>
      %67 = arith.mulf %65, %66 : vector<32x128xf32>
      %68 = vector.broadcast %47 : vector<1x128xf32> to vector<32x128xf32>
      %69 = arith.addf %67, %68 : vector<32x128xf32>
      %70 = arith.truncf %69 : vector<32x128xf32> to vector<32x128xbf16>
      %c0_35 = arith.constant 0 : index
      %c0_36 = arith.constant 0 : index
      %71 = vector.load %arg10[%c0_35, %c0_36] : memref<32x128xbf16, #tpu.memory_space<vmem>>, vector<32x128xbf16>
      tpu.vector_store %arg10[%c0_35, %c0_36], %70 {strides = array<i32>} : memref<32x128xbf16, #tpu.memory_space<vmem>>, vector<32x128xbf16>,
      %72 = vector.extract_strided_slice %26 {offsets = [0, 0], sizes = [1, 128], strides = [1, 1]} : vector<5x128xf32> to vector<1x128xf32>
      %73 = vector.broadcast %72 : vector<1x128xf32> to vector<32x128xf32>
      %74 = arith.addf %69, %73 : vector<32x128xf32>
      %c0_37 = arith.constant 0 : index
      %c0_38 = arith.constant 0 : index
      %75 = vector.load %arg11[%c0_37, %c0_38] : memref<32x128xf32, #tpu.memory_space<vmem>>, vector<32x128xf32>
      tpu.vector_store %arg11[%c0_37, %c0_38], %74 {strides = array<i32>} : memref<32x128xf32, #tpu.memory_space<vmem>>, vector<32x128xf32>,
    } else {
    }
    %c0 = arith.constant 0 : index
    %c0_1 = arith.constant 0 : index
    %3 = vector.load %arg10[%c0, %c0_1] : memref<32x128xbf16, #tpu.memory_space<vmem>>, vector<32x128xbf16>
    %c0_2 = arith.constant 0 : index
    %c0_3 = arith.constant 0 : index
    %4 = vector.load %arg5[%c0_2, %c0_3] : memref<128x512xbf16, #tpu.memory_space<vmem>>, vector<128x512xbf16>
    %cst = arith.constant dense<0.000000e+00> : vector<32x512xf32>
    %5 = tpu.matmul %3, %4, %cst {dimension_numbers = #tpu.dot_dimension_numbers<[1], [0], [0], [1], [0, 0, 1, 1], [], []>} : vector<32x128xbf16>, vector<128x512xbf16>, vector<32x512xf32> -> vector<32x512xf32>
    %c0_4 = arith.constant 0 : index
    %c0_5 = arith.constant 0 : index
    %6 = vector.load %arg6[%c0_4, %c0_5] : memref<1x512xf32, #tpu.memory_space<vmem>>, vector<1x512xf32>
    %7 = vector.broadcast %6 : vector<1x512xf32> to vector<32x512xf32>
    %8 = arith.addf %5, %7 : vector<32x512xf32>
    %cst_6 = arith.constant 5.000000e-01 : f32
    %9 = vector.broadcast %cst_6 : f32 to vector<32x512xf32>
    %10 = arith.mulf %9, %8 : vector<32x512xf32>
    %cst_7 = arith.constant 0.707106769 : f32
    %11 = vector.broadcast %cst_7 : f32 to vector<32x512xf32>
    %12 = arith.mulf %8, %11 : vector<32x512xf32>
    %13 = math.erf %12 : vector<32x512xf32>
    %cst_8 = arith.constant 1.000000e+00 : f32
    %14 = vector.broadcast %cst_8 : f32 to vector<32x512xf32>
    %15 = arith.addf %14, %13 : vector<32x512xf32>
    %16 = arith.mulf %10, %15 : vector<32x512xf32>
    %c0_9 = arith.constant 0 : index
    %c0_10 = arith.constant 0 : index
    %17 = vector.load %arg11[%c0_9, %c0_10] : memref<32x128xf32, #tpu.memory_space<vmem>>, vector<32x128xf32>
    %18 = arith.truncf %16 : vector<32x512xf32> to vector<32x512xbf16>
    %c0_11 = arith.constant 0 : index
    %c0_12 = arith.constant 0 : index
    %19 = vector.load %arg7[%c0_11, %c0_12] : memref<512x128xbf16, #tpu.memory_space<vmem>>, vector<512x128xbf16>
    %cst_13 = arith.constant dense<0.000000e+00> : vector<32x128xf32>
    %20 = tpu.matmul %18, %19, %cst_13 {dimension_numbers = #tpu.dot_dimension_numbers<[1], [0], [0], [1], [0, 0, 1, 1], [], []>} : vector<32x512xbf16>, vector<512x128xbf16>, vector<32x128xf32> -> vector<32x128xf32>
    %21 = arith.addf %17, %20 : vector<32x128xf32>
    %c0_14 = arith.constant 0 : index
    %c0_15 = arith.constant 0 : index
    %22 = vector.load %arg11[%c0_14, %c0_15] : memref<32x128xf32, #tpu.memory_space<vmem>>, vector<32x128xf32>
    tpu.vector_store %arg11[%c0_14, %c0_15], %21 {strides = array<i32>} : memref<32x128xf32, #tpu.memory_space<vmem>>, vector<32x128xf32>,
    %c0_i32_16 = arith.constant 0 : i32
    %23 = arith.cmpi eq, %arg2, %c0_i32_16 : i32
    %24 = arith.extui %23 : i1 to i32
    %c0_i32_17 = arith.constant 0 : i32
    %25 = arith.cmpi ne, %24, %c0_i32_17 : i32
    scf.if %25 {
      %c0_18 = arith.constant 0 : index
      %c0_19 = arith.constant 0 : index
      %26 = vector.load %arg8[%c0_18, %c0_19] : memref<5x128xf32, #tpu.memory_space<vmem>>, vector<5x128xf32>
      %c0_20 = arith.constant 0 : index
      %c0_21 = arith.constant 0 : index
      %27 = vector.load %arg11[%c0_20, %c0_21] : memref<32x128xf32, #tpu.memory_space<vmem>>, vector<32x128xf32>
      %28 = vector.extract_strided_slice %26 {offsets = [3, 0], sizes = [1, 128], strides = [1, 1]} : vector<5x128xf32> to vector<1x128xf32>
      %29 = vector.extract_strided_slice %26 {offsets = [4, 0], sizes = [1, 128], strides = [1, 1]} : vector<5x128xf32> to vector<1x128xf32>
      %cst_22 = arith.constant dense<0.000000e+00> : vector<32xf32>
      %30 = vector.multi_reduction <add>, %27, %cst_22 [1] : vector<32x128xf32> to vector<32xf32>
      %31 = vector.shape_cast %30 : vector<32xf32> to vector<32x1xf32>
      %cst_23 = arith.constant 1.280000e+02 : f32
      %32 = vector.broadcast %cst_23 : f32 to vector<32x1xf32>
      %33 = arith.divf %31, %32 : vector<32x1xf32>
      %34 = vector.broadcast %33 : vector<32x1xf32> to vector<32x128xf32>
      %35 = arith.subf %27, %34 : vector<32x128xf32>
      %36 = arith.mulf %35, %35 : vector<32x128xf32>
      %cst_24 = arith.constant dense<0.000000e+00> : vector<32xf32>
      %37 = vector.multi_reduction <add>, %36, %cst_24 [1] : vector<32x128xf32> to vector<32xf32>
      %38 = vector.shape_cast %37 : vector<32xf32> to vector<32x1xf32>
      %cst_25 = arith.constant 1.280000e+02 : f32
      %39 = vector.broadcast %cst_25 : f32 to vector<32x1xf32>
      %40 = arith.divf %38, %39 : vector<32x1xf32>
      %41 = vector.broadcast %33 : vector<32x1xf32> to vector<32x128xf32>
      %42 = arith.subf %27, %41 : vector<32x128xf32>
      %cst_26 = arith.constant 9.99999974E-6 : f32
      %43 = vector.broadcast %cst_26 : f32 to vector<32x1xf32>
      %44 = arith.addf %40, %43 : vector<32x1xf32>
      %45 = math.rsqrt %44 : vector<32x1xf32>
      %46 = vector.broadcast %45 : vector<32x1xf32> to vector<32x128xf32>
      %47 = arith.mulf %42, %46 : vector<32x128xf32>
      %48 = vector.broadcast %28 : vector<1x128xf32> to vector<32x128xf32>
      %49 = arith.mulf %47, %48 : vector<32x128xf32>
      %50 = vector.broadcast %29 : vector<1x128xf32> to vector<32x128xf32>
      %51 = arith.addf %49, %50 : vector<32x128xf32>
      %c0_27 = arith.constant 0 : index
      %c0_28 = arith.constant 0 : index
      %c0_29 = arith.constant 0 : index
      %52 = vector.load %arg9[%c0_27, %c0_28, %c0_29] : memref<1x32x128xf32, #tpu.memory_space<vmem>>, vector<1x32x128xf32>
      %53 = vector.shape_cast %52 : vector<1x32x128xf32> to vector<32x128xf32>
      %54 = vector.shape_cast %51 : vector<32x128xf32> to vector<1x32x128xf32>
      tpu.vector_store %arg9[%c0_27, %c0_28, %c0_29], %54 {strides = array<i32>} : memref<1x32x128xf32, #tpu.memory_space<vmem>>, vector<1x32x128xf32>,
    } else {
    }
    return
  }
  func.func @transform_0(%arg0: i32, %arg1: i32, %arg2: i32) -> (i32, i32, i32) {
    %c0_i32 = arith.constant 0 : i32
    %c0_i32_0 = arith.constant 0 : i32
    return %arg0, %arg1, %c0_i32 : i32, i32, i32
  }
  func.func @transform_1(%arg0: i32, %arg1: i32, %arg2: i32) -> (i32, i32, i32) {
    %c0_i32 = arith.constant 0 : i32
    %c0_i32_0 = arith.constant 0 : i32
    %c0_i32_1 = arith.constant 0 : i32
    return %arg0, %c0_i32, %c0_i32_0 : i32, i32, i32
  }
  func.func @transform_2(%arg0: i32, %arg1: i32, %arg2: i32) -> (i32, i32) {
    %c0_i32 = arith.constant 0 : i32
    %c0_i32_0 = arith.constant 0 : i32
    return %c0_i32, %arg2 : i32, i32
  }
  func.func @transform_3(%arg0: i32, %arg1: i32, %arg2: i32) -> (i32, i32) {
    %c0_i32 = arith.constant 0 : i32
    %c0_i32_0 = arith.constant 0 : i32
    return %c0_i32, %arg2 : i32, i32
  }
  func.func @transform_4(%arg0: i32, %arg1: i32, %arg2: i32) -> (i32, i32) {
    %c0_i32 = arith.constant 0 : i32
    %c0_i32_0 = arith.constant 0 : i32
    return %arg2, %c0_i32 : i32, i32
  }
  func.func @transform_5(%arg0: i32, %arg1: i32, %arg2: i32) -> (i32, i32) {
    %c0_i32 = arith.constant 0 : i32
    %c0_i32_0 = arith.constant 0 : i32
    %c0_i32_1 = arith.constant 0 : i32
    return %c0_i32, %c0_i32_0 : i32, i32
  }
  func.func @transform_6(%arg0: i32, %arg1: i32, %arg2: i32) -> (i32, i32, i32) {
    %c0_i32 = arith.constant 0 : i32
    %c0_i32_0 = arith.constant 0 : i32
    return %arg0, %arg1, %c0_i32 : i32, i32, i32
  }
}

</mosaic_0001>

<llo_original>
// kernel: transformer_block.1
$region0: #{transformer_block.1}
  #allocation0 [shape = 'u32[]', space=smem, size = 0x4, offset = 0x4, fixed_abs, tag = 'smem constant byte address 0x4 - core index']
  #allocation1 [shape = 'u32[144,128]{1,0:T(1,128)}', space=vmem, size = 0x12000, scoped, tag = 'internal scratch']
  #allocation2 [shape = 'bf16[32,128]{1,0:T(16,128)(2,1)}', space=vmem, size = 0x2000, scoped, tag = 'scratch operand']
  #allocation3 [shape = 'f32[32,128]{1,0:T(8,128)}', space=vmem, size = 0x4000, scoped, tag = 'scratch operand']
  %s0 = inlined_call_operand.hbm [shape: f32[2,32,128], index: 0, kind: input, shape index: {}]
  %s1 = inlined_call_operand.hbm [shape: bf16[2,32,128], index: 1, kind: input, shape index: {}]
  %s2 = inlined_call_operand.hbm [shape: bf16[128,512], index: 2, kind: input, shape index: {}]
  %s3 = inlined_call_operand.hbm [shape: f32[1,512], index: 3, kind: input, shape index: {}]
  %s4 = inlined_call_operand.hbm [shape: bf16[512,128], index: 4, kind: input, shape index: {}]
  %s5 = inlined_call_operand.hbm [shape: f32[5,128], index: 5, kind: input, shape index: {}]
  %s6 = inlined_call_operand.hbm [shape: f32[2,32,128], index: 6, kind: output, shape index: {}]
  %s7 = sld [smem:[#allocation0]]
  $region89: #{transformer_block.1} parent=0
    _
  %s9 = ssub.s32 1, %s7
  %s10 = scalar_select 0, %s9, %s7
  $region1: #{transformer_block.1} parent=0
    #allocation4 [shape = 'u8[32768]{0}', space=vmem, size = 0x8000, scoped, tag = 'input window, operand 0']
    #allocation5 [shape = 's32[2]{0}', space=sflag, size = 0x8, scoped, tag = 'scoped memory for transformer_block.1']
    #allocation6 [shape = 's32[2]{0}', space=sflag, size = 0x8, scoped, tag = 'scoped memory for transformer_block.1']
    #allocation7 [shape = 'u8[8192]{0}', space=vmem, size = 0x2000, scoped, tag = 'input window, operand 1, single buffered']
    #allocation8 [shape = 's32[1]{0}', space=sflag, size = 0x4, scoped, tag = 'scoped memory for transformer_block.1']
    #allocation9 [shape = 'u8[131072]{0}', space=vmem, size = 0x20000, scoped, tag = 'input window, operand 2, single buffered']
    #allocation10 [shape = 'u8[2048]{0}', space=vmem, size = 0x800, scoped, tag = 'input window, operand 3, single buffered']
    #allocation11 [shape = 's32[1]{0}', space=sflag, size = 0x4, scoped, tag = 'scoped memory for transformer_block.1']
    #allocation12 [shape = 'u8[131072]{0}', space=vmem, size = 0x20000, scoped, tag = 'input window, operand 4, single buffered']
    #allocation13 [shape = 'u8[4096]{0}', space=vmem, size = 0x1000, scoped, tag = 'input window, operand 5, single buffered']
    #allocation14 [shape = 's32[1]{0}', space=sflag, size = 0x4, scoped, tag = 'scoped memory for transformer_block.1']
    #allocation15 [shape = 'u8[32768]{0}', space=vmem, size = 0x8000, scoped, tag = 'output window, operand 0']
    %11 = vsyncpa [#allocation5], 0
    %s12 = scalar_lea.sflag [#allocation5], 1
    %13 = vsyncpa %s12, 0
    %14 = vsyncpa [#allocation8], 0
    %15 = vsyncpa [#allocation11], 0
    %16 = vsyncpa [#allocation14], 0
    %17 = vsyncpa [#allocation6], 0
    %s18 = scalar_lea.sflag [#allocation6], 1
    %19 = vsyncpa %s18, 0
    loop: start=0, step=1, limit=4
    $region2: #{transformer_block.1} parent=1 // loop_pre_header
      _
    $region3: #{transformer_block.1} parent=1 // loop_header
      %s21 = sphi 0, %s25
      %p22 = scmp.ge.s32.totalorder %s21, 4
      %s28 = sphi 0, %s47
      %s29 = sphi 0, %s43
      %s30 = sphi 0, %s39
      %s31 = sphi 0, %s28
      %s32 = sphi 0, %s29
      %s33 = sphi 0, %s30
      %s34 = sphi 0, %s31
      %s35 = sphi 0, %s32
      %s36 = sphi 0, %s33
      %s52 = sphi 0, %s54
      %s55 = sphi 0, %s52
      %s56 = sphi 0, %s55
      %s72 = sphi 0, %s56
      %s78 = sphi 0, %s80
      %s81 = sphi 0, %s78
      %s82 = sphi 0, %s81
      %s98 = sphi 0, %s82
      %s104 = sphi 0, %s106
      %s107 = sphi 0, %s104
      %s108 = sphi 0, %s107
      %s124 = sphi 0, %s108
      %s130 = sphi 0, %s132
      %s133 = sphi 0, %s130
      %s134 = sphi 0, %s133
      %s150 = sphi 0, %s134
      %s156 = sphi 0, %s158
      %s159 = sphi 0, %s156
      %s160 = sphi 0, %s159
      %s176 = sphi 0, %s160
      %s180 = sphi 0, %s180
      %s182 = sphi 0, %s180
      %s183 = sphi 0, %s182
      %s197 = sphi 0, %s183
      %s205 = sphi 0, %s207
      %s208 = sphi 0, %s205
      %s209 = sphi 0, %s208
      %s225 = sphi 0, %s209
    $region4: #{transformer_block.1} parent=1 // loop_header_branch
      %24 = sbr.rel (%p22) target = $region8
    $region5: #{transformer_block.1} parent=1 // loop_body
      %s26 = ssub.s32 %s21, 1
      %s27 = ssub.s32 %s21, 2
      %s37 = sadd.s32 1, %s30
      %p38 = scmp.ge.s32.totalorder %s37, 1
      %s39 = scalar_select %p38, 0, %s37
      %s40 = sadd.s32 1, %s29
      %s41 = scalar_select %p38, %s40, %s29
      %p42 = scmp.ge.s32.totalorder %s41, 1
      %s43 = scalar_select %p42, 0, %s41
      %s44 = sadd.s32 1, %s28
      %s45 = scalar_select %p42, %s44, %s28
      %p46 = scmp.ge.s32.totalorder %s45, 2
      %s47 = scalar_select %p46, 0, %s45
      %s48 = ssub.s32 %s28, %s47
      %s49 = ssub.s32 %s29, %s43
      %s50 = sor.u32 %s48, %s49
      %p51 = scmp.eq.s32.totalorder %s50, 0
      %s53 = sadd.s32 %s52, 1
      %s54 = scalar_select %p51, %s52, %s53
      %p57 = pneg %p51
      %p58 = scmp.eq.s32.totalorder %s21, 1
      %p59 = por %p57, %p58
      %p60 = scmp.ne.s32.totalorder %s52, %s55
      %p61 = scmp.eq.s32.totalorder %s21, 0
      %p62 = por %p60, %p61
      %p63 = scmp.ne.s32.totalorder %s52, %s55
      %p64 = scmp.eq.s32.totalorder %s26, 1
      %p65 = por %p63, %p64
      %p66 = scmp.ne.s32.totalorder %s55, %s56
      %p67 = scmp.eq.s32.totalorder %s26, 0
      %p68 = por %p66, %p67
      %p69 = scmp.ne.s32.totalorder %s55, %s56
      %p70 = scmp.eq.s32.totalorder %s27, 1
      %p71 = por %p69, %p70
      %p73 = scmp.ne.s32.totalorder %s56, %s72
      %p74 = scmp.eq.s32.totalorder %s27, 0
      %p75 = por %p73, %p74
      %s76 = ssub.s32 %s28, %s47
      %p77 = scmp.eq.s32.totalorder %s76, 0
      %s79 = sadd.s32 %s78, 1
      %s80 = scalar_select %p77, %s78, %s79
      %p83 = pneg %p77
      %p84 = scmp.eq.s32.totalorder %s21, 1
      %p85 = por %p83, %p84
      %p86 = scmp.ne.s32.totalorder %s78, %s81
      %p87 = scmp.eq.s32.totalorder %s21, 0
      %p88 = por %p86, %p87
      %p89 = scmp.ne.s32.totalorder %s78, %s81
      %p90 = scmp.eq.s32.totalorder %s26, 1
      %p91 = por %p89, %p90
      %p92 = scmp.ne.s32.totalorder %s81, %s82
      %p93 = scmp.eq.s32.totalorder %s26, 0
      %p94 = por %p92, %p93
      %p95 = scmp.ne.s32.totalorder %s81, %s82
      %p96 = scmp.eq.s32.totalorder %s27, 1
      %p97 = por %p95, %p96
      %p99 = scmp.ne.s32.totalorder %s82, %s98
      %p100 = scmp.eq.s32.totalorder %s27, 0
      %p101 = por %p99, %p100
      %s102 = ssub.s32 %s30, %s39
      %p103 = scmp.eq.s32.totalorder %s102, 0
      %s105 = sadd.s32 %s104, 1
      %s106 = scalar_select %p103, %s104, %s105
      %p109 = pneg %p103
      %p110 = scmp.eq.s32.totalorder %s21, 1
      %p111 = por %p109, %p110
      %p112 = scmp.ne.s32.totalorder %s104, %s107
      %p113 = scmp.eq.s32.totalorder %s21, 0
      %p114 = por %p112, %p113
      %p115 = scmp.ne.s32.totalorder %s104, %s107
      %p116 = scmp.eq.s32.totalorder %s26, 1
      %p117 = por %p115, %p116
      %p118 = scmp.ne.s32.totalorder %s107, %s108
      %p119 = scmp.eq.s32.totalorder %s26, 0
      %p120 = por %p118, %p119
      %p121 = scmp.ne.s32.totalorder %s107, %s108
      %p122 = scmp.eq.s32.totalorder %s27, 1
      %p123 = por %p121, %p122
      %p125 = scmp.ne.s32.totalorder %s108, %s124
      %p126 = scmp.eq.s32.totalorder %s27, 0
      %p127 = por %p125, %p126
      %s128 = ssub.s32 %s30, %s39
      %p129 = scmp.eq.s32.totalorder %s128, 0
      %s131 = sadd.s32 %s130, 1
      %s132 = scalar_select %p129, %s130, %s131
      %p135 = pneg %p129
      %p136 = scmp.eq.s32.totalorder %s21, 1
      %p137 = por %p135, %p136
      %p138 = scmp.ne.s32.totalorder %s130, %s133
      %p139 = scmp.eq.s32.totalorder %s21, 0
      %p140 = por %p138, %p139
      %p141 = scmp.ne.s32.totalorder %s130, %s133
      %p142 = scmp.eq.s32.totalorder %s26, 1
      %p143 = por %p141, %p142
      %p144 = scmp.ne.s32.totalorder %s133, %s134
      %p145 = scmp.eq.s32.totalorder %s26, 0
      %p146 = por %p144, %p145
      %p147 = scmp.ne.s32.totalorder %s133, %s134
      %p148 = scmp.eq.s32.totalorder %s27, 1
      %p149 = por %p147, %p148
      %p151 = scmp.ne.s32.totalorder %s134, %s150
      %p152 = scmp.eq.s32.totalorder %s27, 0
      %p153 = por %p151, %p152
      %s154 = ssub.s32 %s30, %s39
      %p155 = scmp.eq.s32.totalorder %s154, 0
      %s157 = sadd.s32 %s156, 1
      %s158 = scalar_select %p155, %s156, %s157
      %p161 = pneg %p155
      %p162 = scmp.eq.s32.totalorder %s21, 1
      %p163 = por %p161, %p162
      %p164 = scmp.ne.s32.totalorder %s156, %s159
      %p165 = scmp.eq.s32.totalorder %s21, 0
      %p166 = por %p164, %p165
      %p167 = scmp.ne.s32.totalorder %s156, %s159
      %p168 = scmp.eq.s32.totalorder %s26, 1
      %p169 = por %p167, %p168
      %p170 = scmp.ne.s32.totalorder %s159, %s160
      %p171 = scmp.eq.s32.totalorder %s26, 0
      %p172 = por %p170, %p171
      %p173 = scmp.ne.s32.totalorder %s159, %s160
      %p174 = scmp.eq.s32.totalorder %s27, 1
      %p175 = por %p173, %p174
      %p177 = scmp.ne.s32.totalorder %s160, %s176
      %p178 = scmp.eq.s32.totalorder %s27, 0
      %p179 = por %p177, %p178
      %s181 = sadd.s32 %s180, 1
      %p184 = scmp.eq.s32.totalorder %s21, 1
      %p185 = scmp.ne.s32.totalorder %s180, %s182
      %p186 = scmp.eq.s32.totalorder %s21, 0
      %p187 = por %p185, %p186
      %p188 = scmp.ne.s32.totalorder %s180, %s182
      %p189 = scmp.eq.s32.totalorder %s26, 1
      %p190 = por %p188, %p189
      %p191 = scmp.ne.s32.totalorder %s182, %s183
      %p192 = scmp.eq.s32.totalorder %s26, 0
      %p193 = por %p191, %p192
      %p194 = scmp.ne.s32.totalorder %s182, %s183
      %p195 = scmp.eq.s32.totalorder %s27, 1
      %p196 = por %p194, %p195
      %p198 = scmp.ne.s32.totalorder %s183, %s197
      %p199 = scmp.eq.s32.totalorder %s27, 0
      %p200 = por %p198, %p199
      %s201 = ssub.s32 %s28, %s47
      %s202 = ssub.s32 %s29, %s43
      %s203 = sor.u32 %s201, %s202
      %p204 = scmp.eq.s32.totalorder %s203, 0
      %s206 = sadd.s32 %s205, 1
      %s207 = scalar_select %p204, %s205, %s206
      %p210 = pneg %p204
      %p211 = scmp.eq.s32.totalorder %s21, 1
      %p212 = por %p210, %p211
      %p213 = scmp.ne.s32.totalorder %s205, %s208
      %p214 = scmp.eq.s32.totalorder %s21, 0
      %p215 = por %p213, %p214
      %p216 = scmp.ne.s32.totalorder %s205, %s208
      %p217 = scmp.eq.s32.totalorder %s26, 1
      %p218 = por %p216, %p217
      %p219 = scmp.ne.s32.totalorder %s208, %s209
      %p220 = scmp.eq.s32.totalorder %s26, 0
      %p221 = por %p219, %p220
      %p222 = scmp.ne.s32.totalorder %s208, %s209
      %p223 = scmp.eq.s32.totalorder %s27, 1
      %p224 = por %p222, %p223
      %p226 = scmp.ne.s32.totalorder %s209, %s225
      %p227 = scmp.eq.s32.totalorder %s27, 0
      %p228 = por %p226, %p227
      %p229 = scmp.le.s32.totalorder 1, %s21
      %p230 = scmp.lt.s32.totalorder %s21, 3
      %p231 = pnand %p229, %p230
      %p232 = pneg %p231
      // Predicated region
      $region9: #{transformer_block.1} parent=5 // pred_check
        _
      $region10: #{transformer_block.1} parent=5 // pred_check_branch
        %234 = sbr.rel (%p231) target = $region12
      $region11: #{transformer_block.1} parent=5 // pred_region
        %s235 = ssub.s32 %s21, 1
        // Predicated region
        $region13: #{transformer_block.1} parent=11 // pred_check
          %p236 = pneg %p94
        $region14: #{transformer_block.1} parent=11 // pred_check_branch
          %238 = sbr.rel (%p236) target = $region16
        $region15: #{transformer_block.1} parent=11 // pred_region
          %s240 = ssub.s32 256, 256
          %241 = vsyncadd [#allocation8], %s240
          %s242 = smul.addr %s31, 4
          %s243 = smul.addr %s242, 64
          %s244 = scalar_lea.hbm %s1, %s243
          %s245 = sshll.u32 [#allocation7], 4
          %s246 = int_to_ptr.vmem [resolvable:$true] %s245
          %251 = dma.hbm_to_vmem [thread:$0]  %s244, 256, %s246, [#allocation8], 64, 64, 4
        $region16: #{transformer_block.1} parent=11 // pred_fallthru
          _
        // Predicated region
        $region17: #{transformer_block.1} parent=11 // pred_check
          %p252 = pneg %p120
        $region18: #{transformer_block.1} parent=11 // pred_check_branch
          %254 = sbr.rel (%p252) target = $region20
        $region19: #{transformer_block.1} parent=11 // pred_region
          %s255 = smul.u32 4, %s33
          %s257 = ssub.s32 4096, 4096
          %258 = vsyncadd [#allocation8], %s257
          %s259 = smul.addr %s255, 64
          %s260 = scalar_lea.hbm %s2, %s259
          %s261 = sshll.u32 [#allocation9], 4
          %s262 = int_to_ptr.vmem [resolvable:$true] %s261
          %267 = dma.hbm_to_vmem [thread:$0]  %s260, 4096, %s262, [#allocation8], 256, 256, 16
        $region20: #{transformer_block.1} parent=11 // pred_fallthru
          _
        // Predicated region
        $region21: #{transformer_block.1} parent=11 // pred_check
          %p268 = pneg %p146
        $region22: #{transformer_block.1} parent=11 // pred_check_branch
          %270 = sbr.rel (%p268) target = $region24
        $region23: #{transformer_block.1} parent=11 // pred_region
          %s271 = smul.u32 4, %s33
          %s273 = ssub.s32 64, 64
          %274 = vsyncadd [#allocation11], %s273
          %s275 = smul.addr %s271, 16
          %s276 = scalar_lea.hbm %s3, %s275
          %s278 = sshll.u32 [#allocation10], 4
          %s279 = int_to_ptr.vmem [resolvable:$true] %s278
          %281 = dma.hbm_to_vmem [thread:$0]  %s276, 64, %s279, [#allocation11]
        $region24: #{transformer_block.1} parent=11 // pred_fallthru
          _
        // Predicated region
        $region25: #{transformer_block.1} parent=11 // pred_check
          %p282 = pneg %p172
        $region26: #{transformer_block.1} parent=11 // pred_check_branch
          %284 = sbr.rel (%p282) target = $region28
        $region27: #{transformer_block.1} parent=11 // pred_region
          %s285 = smul.u32 64, %s33
          %s287 = ssub.s32 4096, 4096
          %288 = vsyncadd [#allocation11], %s287
          %s289 = smul.addr %s285, 64
          %s290 = scalar_lea.hbm %s4, %s289
          %s291 = sshll.u32 [#allocation12], 4
          %s292 = int_to_ptr.vmem [resolvable:$true] %s291
          %297 = dma.hbm_to_vmem [thread:$0]  %s290, 4096, %s292, [#allocation11], 64, 64, 4
        $region28: #{transformer_block.1} parent=11 // pred_fallthru
          _
        // Predicated region
        $region29: #{transformer_block.1} parent=11 // pred_check
          %p298 = pneg %p193
        $region30: #{transformer_block.1} parent=11 // pred_check_branch
          %300 = sbr.rel (%p298) target = $region32
        $region31: #{transformer_block.1} parent=11 // pred_region
          %s302 = ssub.s32 128, 128
          %303 = vsyncadd [#allocation14], %s302
          %s305 = sshll.u32 [#allocation13], 4
          %s306 = int_to_ptr.vmem [resolvable:$true] %s305
          %308 = dma.hbm_to_vmem [thread:$0]  %s5, 128, %s306, [#allocation14]
        $region32: #{transformer_block.1} parent=11 // pred_fallthru
          _
      $region12: #{transformer_block.1} parent=5 // pred_fallthru
        _
      %p309 = scmp.lt.s32.totalorder %s21, 2
      // Predicated region
      $region33: #{transformer_block.1} parent=5 // pred_check
        %p310 = pneg %p309
      $region34: #{transformer_block.1} parent=5 // pred_check_branch
        %312 = sbr.rel (%p310) target = $region36
      $region35: #{transformer_block.1} parent=5 // pred_region
        // Predicated region
        $region37: #{transformer_block.1} parent=35 // pred_check
          %p313 = pneg %p62
        $region38: #{transformer_block.1} parent=35 // pred_check_branch
          %315 = sbr.rel (%p313) target = $region40
        $region39: #{transformer_block.1} parent=35 // pred_region
          %s316 = sand.u32 %s52, 1
          %s317 = scalar_lea.sflag [#allocation5], %s316
          %s318 = sand.u32 %s52, 1
          %s319 = smul.addr %s318, 32
          %s320 = scalar_lea.vmem [#allocation4], %s319
          %s321 = smul.u32 4, %s29
          %s323 = ssub.s32 512, 512
          %324 = vsyncadd %s317, %s323
          %s325 = smul.addr %s28, 4
          %s326 = sadd.s32 %s321, %s325
          %s327 = smul.addr %s326, 128
          %s328 = scalar_lea.hbm %s0, %s327
          %s329 = sshll.u32 %s320, 4
          %s330 = int_to_ptr.vmem [resolvable:$true] %s329
          %335 = dma.hbm_to_vmem [thread:$0]  %s328, 512, %s330, %s317, 128, 128, 8
        $region40: #{transformer_block.1} parent=35 // pred_fallthru
          _
      $region36: #{transformer_block.1} parent=5 // pred_fallthru
        _
      %p336 = scmp.le.s32.totalorder 1, %s21
      %p337 = scmp.lt.s32.totalorder %s21, 3
      %p338 = pnand %p336, %p337
      %p339 = pneg %p338
      // Predicated region
      $region41: #{transformer_block.1} parent=5 // pred_check
        _
      $region42: #{transformer_block.1} parent=5 // pred_check_branch
        %341 = sbr.rel (%p338) target = $region44
      $region43: #{transformer_block.1} parent=5 // pred_region
        %s342 = ssub.s32 %s21, 1
        %s343 = sand.u32 %s55, 1
        %s344 = scalar_lea.sflag [#allocation5], %s343
        %s345 = sand.u32 %s55, 1
        %s346 = smul.addr %s345, 32
        %s347 = scalar_lea.vmem [#allocation4], %s346
        // Predicated region
        $region45: #{transformer_block.1} parent=43 // pred_check
          %p348 = pneg %p68
        $region46: #{transformer_block.1} parent=43 // pred_check_branch
          %350 = sbr.rel (%p348) target = $region48
        $region47: #{transformer_block.1} parent=43 // pred_region
          %351 = dma.done %s344, 512
        $region48: #{transformer_block.1} parent=43 // pred_fallthru
          _
        // Predicated region
        $region49: #{transformer_block.1} parent=43 // pred_check
          %p352 = pneg %p94
        $region50: #{transformer_block.1} parent=43 // pred_check_branch
          %354 = sbr.rel (%p352) target = $region52
        $region51: #{transformer_block.1} parent=43 // pred_region
          %355 = dma.done [#allocation8], 256
        $region52: #{transformer_block.1} parent=43 // pred_fallthru
          _
        // Predicated region
        $region53: #{transformer_block.1} parent=43 // pred_check
          %p356 = pneg %p120
        $region54: #{transformer_block.1} parent=43 // pred_check_branch
          %358 = sbr.rel (%p356) target = $region56
        $region55: #{transformer_block.1} parent=43 // pred_region
          %359 = dma.done [#allocation8], 4096
        $region56: #{transformer_block.1} parent=43 // pred_fallthru
          _
        // Predicated region
        $region57: #{transformer_block.1} parent=43 // pred_check
          %p360 = pneg %p146
        $region58: #{transformer_block.1} parent=43 // pred_check_branch
          %362 = sbr.rel (%p360) target = $region60
        $region59: #{transformer_block.1} parent=43 // pred_region
          %363 = dma.done [#allocation11], 64
        $region60: #{transformer_block.1} parent=43 // pred_fallthru
          _
        // Predicated region
        $region61: #{transformer_block.1} parent=43 // pred_check
          %p364 = pneg %p172
        $region62: #{transformer_block.1} parent=43 // pred_check_branch
          %366 = sbr.rel (%p364) target = $region64
        $region63: #{transformer_block.1} parent=43 // pred_region
          %367 = dma.done [#allocation11], 4096
        $region64: #{transformer_block.1} parent=43 // pred_fallthru
          _
        // Predicated region
        $region65: #{transformer_block.1} parent=43 // pred_check
          %p368 = pneg %p193
        $region66: #{transformer_block.1} parent=43 // pred_check_branch
          %370 = sbr.rel (%p368) target = $region68
        $region67: #{transformer_block.1} parent=43 // pred_region
          %371 = dma.done [#allocation14], 128
        $region68: #{transformer_block.1} parent=43 // pred_fallthru
          _
        %s372 = sand.u32 %s55, 1
        %s373 = scalar_lea.sflag [#allocation5], %s372
        %s374 = sand.u32 %s55, 1
        %s375 = smul.addr %s374, 32
        %s376 = scalar_lea.vmem [#allocation4], %s375
        %p377 = pneg %p68
        %p378 = pneg %p65
        %p379 = pneg %p94
        %p380 = pneg %p91
        %p381 = pneg %p120
        %p382 = pneg %p117
        %p383 = pneg %p146
        %p384 = pneg %p143
        %p385 = pneg %p172
        %p386 = pneg %p169
        %p387 = pneg %p193
        %p388 = pneg %p190
        %p389 = pneg %p221
        %p390 = pneg %p218
        %s391 = sand.u32 %s208, 1
        %s392 = scalar_lea.sflag [#allocation6], %s391
        %s393 = sand.u32 %s208, 1
        %s394 = smul.addr %s393, 32
        %s395 = scalar_lea.vmem [#allocation15], %s394
        %s396 = smul.u32 4, %s32
        %s397 = smul.u32 4, %s33
        %s398 = smul.u32 4, %s33
        %s399 = smul.u32 64, %s33
        %s400 = smul.u32 4, %s32
        %p402 = scmp.eq.s32.totalorder %s33, 0
        // Predicated region
        $region69: #{transformer_block.1} parent=43 // pred_check
          %p403 = pneg %p402
        $region70: #{transformer_block.1} parent=43 // pred_check_branch
          %405 = sbr.rel (%p403) target = $region72
        $region71: #{transformer_block.1} parent=43 // pred_region
          %v406 = vld [vmem:[#allocation13] sm:$0x1f]
          %v407 = vld [vmem:[%s347] sm:$0xff]
          %v408 = vld [vmem:[%s347 + $0x8] sm:$0xff]
          %v409 = vld [vmem:[%s347 + $0x10] sm:$0xff]
          %v410 = vld [vmem:[%s347 + $0x18] sm:$0xff]
          %v411 = vpack.c.bf16 %v408, %v407
          %v412 = vpack.c.bf16 %v410, %v409
          %v413 = vld [vmem:[#allocation7] sm:$0xf]
          %v414 = vld [vmem:[#allocation7 + $0x4] sm:$0xf]
          %v415 = vld [vmem:[#allocation7 + $0x8] sm:$0xf]
          %v416 = vld [vmem:[#allocation7 + $0xc] sm:$0xf]
          %v421 = vunpack.c.l.b16 %v413
          %v422 = vunpack.c.l.b16 %v414
          %v423 = vunpack.c.l.b16 %v415
          %v424 = vunpack.c.l.b16 %v416
          %v425 = vpack.c.b16 %v422, %v421
          %v426 = vpack.c.b16 %v424, %v423
          %429 = vmatprep.subr.bf16.mxu0 0
          %430 = vmatpush1.bf16.xpose.msra.mxu0 %v425
          %431 = vmatprep.subr.bf16.mxu0 0
          %432 = vmatpush1.bf16.xpose.msra.mxu0 %v426
          %433 = vmatprep.subr.bf16.mxu0 0
          %434 = vmatpush1.bf16.xpose.msra.mxu0 0
          %435 = vmatprep.subr.bf16.mxu0 0
          %436 = vmatpush1.bf16.xpose.msra.mxu0 0
          %437 = vmatprep.subr.bf16.mxu0 0
          %438 = vmatpush1.bf16.xpose.msra.mxu0 0
          %439 = vmatprep.subr.bf16.mxu0 0
          %440 = vmatpush1.bf16.xpose.msra.mxu0 0
          %441 = vmatprep.subr.bf16.mxu0 0
          %442 = vmatpush1.bf16.xpose.msra.mxu0 0
          %443 = vmatprep.subr.bf16.mxu0 0
          %444 = vmatpush1.bf16.xpose.msra.mxu0 0
          %445 = vmatprep.subr.bf16.mxu0 0
          %446 = vmatpush1.bf16.xpose.msra.mxu0 0
          %447 = vmatprep.subr.bf16.mxu0 0
          %448 = vmatpush1.bf16.xpose.msra.mxu0 0
          %449 = vmatprep.subr.bf16.mxu0 0
          %450 = vmatpush1.bf16.xpose.msra.mxu0 0
          %451 = vmatprep.subr.bf16.mxu0 0
          %452 = vmatpush1.bf16.xpose.msra.mxu0 0
          %453 = vmatprep.subr.bf16.mxu0 0
          %454 = vmatpush1.bf16.xpose.msra.mxu0 0
          %455 = vmatprep.subr.bf16.mxu0 0
          %456 = vmatpush1.bf16.xpose.msra.mxu0 0
          %457 = vmatprep.subr.bf16.mxu0 0
          %458 = vmatpush1.bf16.xpose.msra.mxu0 0
          %459 = vmatprep.subr.bf16.mxu0 0
          %460 = vmatpush1.bf16.xpose.msra.mxu0 0
          %461 = vmatprep.mubr.bf16.mxu0 0
          %462 = vmatmul.mubr.bf16.gmra.mrb[0].mxu0 %v411
          %v463 = vpop.f32.mrb[0].mxu0
          %v464 = vadd.f32 0.0, %v463
          %v465 = vpop.f32.mrb[0].mxu0
          %v466 = vpop.f32.mrb[0].mxu0
          %v467 = vadd.f32 0.0, %v466
          %v468 = vpop.f32.mrb[0].mxu0
          %469 = vmatprep.mubr.bf16.mxu0 0
          %470 = vmatmul.mubr.bf16.gmra.mrb[0].mxu0 %v412
          %v471 = vpop.f32.mrb[0].mxu0
          %v472 = vadd.f32 0.0, %v471
          %v473 = vpop.f32.mrb[0].mxu0
          %v474 = vpop.f32.mrb[0].mxu0
          %v475 = vadd.f32 0.0, %v474
          %v476 = vpop.f32.mrb[0].mxu0
          %477 = vdwg.mxu0
          %vm478 = vcmask 261120
          %v479 = vsel %vm478, %v464, -inf
          %480 = vmax.xlane.f32.xlu0 %v479
          %v481 = vpop.xlane.xlu0 %480
          %v482 = vsel %vm478, %v467, -inf
          %483 = vmax.xlane.f32.xlu0 %v482
          %v484 = vpop.xlane.xlu0 %483
          %v485 = vsel %vm478, %v472, -inf
          %486 = vmax.xlane.f32.xlu0 %v485
          %v487 = vpop.xlane.xlu0 %486
          %v488 = vsel %vm478, %v475, -inf
          %489 = vmax.xlane.f32.xlu0 %v488
          %v490 = vpop.xlane.xlu0 %489
          %v491 = vsub.f32 %v464, %v481
          %v492 = vsub.f32 %v467, %v484
          %v493 = vsub.f32 %v472, %v487
          %v494 = vsub.f32 %v475, %v490
          %v495 = vmul.f32 %v491, 1.442695
          %v496 = vpow.pop %v495
          %v497 = vmul.f32 %v492, 1.442695
          %v498 = vpow.pop %v497
          %v499 = vmul.f32 %v493, 1.442695
          %v500 = vpow.pop %v499
          %v501 = vmul.f32 %v494, 1.442695
          %v502 = vpow.pop %v501
          %v503 = vsel %vm478, %v496, 0.0
          %504 = vadd.xlane.f32.xlu0 %v503
          %v505 = vpop.xlane.xlu0 %504
          %v506 = vsel %vm478, %v498, 0.0
          %507 = vadd.xlane.f32.xlu0 %v506
          %v508 = vpop.xlane.xlu0 %507
          %v509 = vsel %vm478, %v500, 0.0
          %510 = vadd.xlane.f32.xlu0 %v509
          %v511 = vpop.xlane.xlu0 %510
          %v512 = vsel %vm478, %v502, 0.0
          %513 = vadd.xlane.f32.xlu0 %v512
          %v514 = vpop.xlane.xlu0 %513
          %v515 = vrcp.pop %v505
          %v516 = vrcp.pop %v508
          %v517 = vrcp.pop %v511
          %v518 = vrcp.pop %v514
          %v519 = vmul.f32 %v496, %v515
          %v520 = vmul.f32 %v498, %v516
          %v521 = vmul.f32 %v500, %v517
          %v522 = vmul.f32 %v502, %v518
          %v523 = vpack.c.bf16 %v520, %v519
          %v524 = vpack.c.bf16 %v522, %v521
          %v526 = vsel %vm478, %v523, 0
          %v529 = vsel %vm478, %v524, 0
          %531 = vmatprep.subr.bf16.mxu0 0
          %532 = vmatpush1.bf16.msra.mxu0 %v425
          %533 = vmatprep.subr.bf16.mxu0 0
          %534 = vmatpush1.bf16.msra.mxu0 %v426
          %535 = vmatprep.subr.bf16.mxu0 0
          %536 = vmatpush1.bf16.msra.mxu0 0
          %537 = vmatprep.subr.bf16.mxu0 0
          %538 = vmatpush1.bf16.msra.mxu0 0
          %539 = vmatprep.subr.bf16.mxu0 0
          %540 = vmatpush1.bf16.msra.mxu0 0
          %541 = vmatprep.subr.bf16.mxu0 0
          %542 = vmatpush1.bf16.msra.mxu0 0
          %543 = vmatprep.subr.bf16.mxu0 0
          %544 = vmatpush1.bf16.msra.mxu0 0
          %545 = vmatprep.subr.bf16.mxu0 0
          %546 = vmatpush1.bf16.msra.mxu0 0
          %547 = vmatprep.subr.bf16.mxu0 0
          %548 = vmatpush1.bf16.msra.mxu0 0
          %549 = vmatprep.subr.bf16.mxu0 0
          %550 = vmatpush1.bf16.msra.mxu0 0
          %551 = vmatprep.subr.bf16.mxu0 0
          %552 = vmatpush1.bf16.msra.mxu0 0
          %553 = vmatprep.subr.bf16.mxu0 0
          %554 = vmatpush1.bf16.msra.mxu0 0
          %555 = vmatprep.subr.bf16.mxu0 0
          %556 = vmatpush1.bf16.msra.mxu0 0
          %557 = vmatprep.subr.bf16.mxu0 0
          %558 = vmatpush1.bf16.msra.mxu0 0
          %559 = vmatprep.subr.bf16.mxu0 0
          %560 = vmatpush1.bf16.msra.mxu0 0
          %561 = vmatprep.subr.bf16.mxu0 0
          %562 = vmatpush1.bf16.msra.mxu0 0
          %563 = vmatprep.mubr.bf16.mxu0 0
          %564 = vmatmul.mubr.bf16.gmra.mrb[0].mxu0 %v526
          %v565 = vpop.f32.mrb[0].mxu0
          %v566 = vadd.f32 0.0, %v565
          %v567 = vpop.f32.mrb[0].mxu0
          %v568 = vpop.f32.mrb[0].mxu0
          %v569 = vadd.f32 0.0, %v568
          %v570 = vpop.f32.mrb[0].mxu0
          %571 = vmatprep.mubr.bf16.mxu0 0
          %572 = vmatmul.mubr.bf16.gmra.mrb[0].mxu0 %v529
          %v573 = vpop.f32.mrb[0].mxu0
          %v574 = vadd.f32 0.0, %v573
          %v575 = vpop.f32.mrb[0].mxu0
          %v576 = vpop.f32.mrb[0].mxu0
          %v577 = vadd.f32 0.0, %v576
          %v578 = vpop.f32.mrb[0].mxu0
          %579 = vdwg.mxu0
          %v580 = vadd.f32 %v407, %v566
          %v581 = vadd.f32 %v408, %v569
          %v582 = vadd.f32 %v409, %v574
          %v583 = vadd.f32 %v410, %v577
          %584 = vadd.xlane.f32.xlu0 %v580
          %v585 = vpop.xlane.xlu0 %584
          %586 = vadd.xlane.f32.xlu0 %v581
          %v587 = vpop.xlane.xlu0 %586
          %588 = vadd.xlane.f32.xlu0 %v582
          %v589 = vpop.xlane.xlu0 %588
          %590 = vadd.xlane.f32.xlu0 %v583
          %v591 = vpop.xlane.xlu0 %590
          %v592 = vrcp.pop 128.0
          %v593 = vmul.f32 %v585, %v592
          %v594 = vmul.f32 %v587, %v592
          %v595 = vmul.f32 %v589, %v592
          %v596 = vmul.f32 %v591, %v592
          %v597 = vsub.f32 %v580, %v593
          %v598 = vsub.f32 %v581, %v594
          %v599 = vsub.f32 %v582, %v595
          %v600 = vsub.f32 %v583, %v596
          %v601 = vmul.f32 %v597, %v597
          %v602 = vmul.f32 %v598, %v598
          %v603 = vmul.f32 %v599, %v599
          %v604 = vmul.f32 %v600, %v600
          %605 = vadd.xlane.f32.xlu0 %v601
          %v606 = vpop.xlane.xlu0 %605
          %607 = vadd.xlane.f32.xlu0 %v602
          %v608 = vpop.xlane.xlu0 %607
          %609 = vadd.xlane.f32.xlu0 %v603
          %v610 = vpop.xlane.xlu0 %609
          %611 = vadd.xlane.f32.xlu0 %v604
          %v612 = vpop.xlane.xlu0 %611
          %v613 = vmul.f32 %v606, %v592
          %v614 = vmul.f32 %v608, %v592
          %v615 = vmul.f32 %v610, %v592
          %v616 = vmul.f32 %v612, %v592
          %v617 = vadd.f32 %v613, 1e-05
          %v618 = vadd.f32 %v614, 1e-05
          %v619 = vadd.f32 %v615, 1e-05
          %v620 = vadd.f32 %v616, 1e-05
          %v621 = vrsqrt.pop %v617
          %v622 = vrsqrt.pop %v618
          %v623 = vrsqrt.pop %v619
          %v624 = vrsqrt.pop %v620
          %v625 = vmul.f32 %v597, %v621
          %v626 = vmul.f32 %v598, %v622
          %v627 = vmul.f32 %v599, %v623
          %v628 = vmul.f32 %v600, %v624
          %v629 = vlaneseq
          %v630 = vshrl.u32 %v629, 7
          %v631 = vsub.s32 1, %v630
          %v632 = vrot.slane %v406, %v631
          %v633 = vmul.f32 %v625, %v632
          %v634 = vmul.f32 %v626, %v632
          %v635 = vmul.f32 %v627, %v632
          %v636 = vmul.f32 %v628, %v632
          %v637 = vlaneseq
          %v638 = vshrl.u32 %v637, 7
          %v639 = vsub.s32 2, %v638
          %v640 = vrot.slane %v406, %v639
          %v641 = vadd.f32 %v633, %v640
          %v642 = vadd.f32 %v634, %v640
          %v643 = vadd.f32 %v635, %v640
          %v644 = vadd.f32 %v636, %v640
          %v645 = vpack.c.bf16 %v642, %v641
          %v646 = vpack.c.bf16 %v644, %v643
          %647 = vst [vmem:[#allocation2] sm:$0xff] %v645
          %648 = vst [vmem:[#allocation2 + $0x8] sm:$0xff] %v646
          %v649 = vlaneseq
          %v650 = vshrl.u32 %v649, 7
          %v651 = vsub.s32 0, %v650
          %v652 = vrot.slane %v406, %v651
          %v653 = vadd.f32 %v641, %v652
          %v654 = vadd.f32 %v642, %v652
          %v655 = vadd.f32 %v643, %v652
          %v656 = vadd.f32 %v644, %v652
          %657 = vst [vmem:[#allocation3] sm:$0xff] %v653
          %658 = vst [vmem:[#allocation3 + $0x8] sm:$0xff] %v654
          %659 = vst [vmem:[#allocation3 + $0x10] sm:$0xff] %v655
          %660 = vst [vmem:[#allocation3 + $0x18] sm:$0xff] %v656
        $region72: #{transformer_block.1} parent=43 // pred_fallthru
          _
        %v661 = vld [vmem:[#allocation2] sm:$0xff]
        %v662 = vld [vmem:[#allocation2 + $0x8] sm:$0xff]
        %v663 = vld [vmem:[#allocation9] sm:$0xff]
        %v664 = vld [vmem:[#allocation9 + $0x8] sm:$0xff]
        %v665 = vld [vmem:[#allocation9 + $0x10] sm:$0xff]
        %v666 = vld [vmem:[#allocation9 + $0x18] sm:$0xff]
        %v667 = vld [vmem:[#allocation9 + $0x20] sm:$0xff]
        %v668 = vld [vmem:[#allocation9 + $0x28] sm:$0xff]
        %v669 = vld [vmem:[#allocation9 + $0x30] sm:$0xff]
        %v670 = vld [vmem:[#allocation9 + $0x38] sm:$0xff]
        %v671 = vld [vmem:[#allocation9 + $0x40] sm:$0xff]
        %v672 = vld [vmem:[#allocation9 + $0x48] sm:$0xff]
        %v673 = vld [vmem:[#allocation9 + $0x50] sm:$0xff]
        %v674 = vld [vmem:[#allocation9 + $0x58] sm:$0xff]
        %v675 = vld [vmem:[#allocation9 + $0x60] sm:$0xff]
        %v676 = vld [vmem:[#allocation9 + $0x68] sm:$0xff]
        %v677 = vld [vmem:[#allocation9 + $0x70] sm:$0xff]
        %v678 = vld [vmem:[#allocation9 + $0x78] sm:$0xff]
        %v679 = vld [vmem:[#allocation9 + $0x80] sm:$0xff]
        %v680 = vld [vmem:[#allocation9 + $0x88] sm:$0xff]
        %v681 = vld [vmem:[#allocation9 + $0x90] sm:$0xff]
        %v682 = vld [vmem:[#allocation9 + $0x98] sm:$0xff]
        %v683 = vld [vmem:[#allocation9 + $0xa0] sm:$0xff]
        %v684 = vld [vmem:[#allocation9 + $0xa8] sm:$0xff]
        %v685 = vld [vmem:[#allocation9 + $0xb0] sm:$0xff]
        %v686 = vld [vmem:[#allocation9 + $0xb8] sm:$0xff]
        %v687 = vld [vmem:[#allocation9 + $0xc0] sm:$0xff]
        %v688 = vld [vmem:[#allocation9 + $0xc8] sm:$0xff]
        %v689 = vld [vmem:[#allocation9 + $0xd0] sm:$0xff]
        %v690 = vld [vmem:[#allocation9 + $0xd8] sm:$0xff]
        %v691 = vld [vmem:[#allocation9 + $0xe0] sm:$0xff]
        %v692 = vld [vmem:[#allocation9 + $0xe8] sm:$0xff]
        %v693 = vld [vmem:[#allocation9 + $0xf0] sm:$0xff]
        %v694 = vld [vmem:[#allocation9 + $0xf8] sm:$0xff]
        %v695 = vld [vmem:[#allocation10] sm:$0xf]
        %v697 = vlaneseq
        %v698 = vshrl.u32 %v697, 7
        %v699 = vsub.s32 0, %v698
        %v700 = vrot.slane %v695, %v699
        %v701 = vlaneseq
        %v702 = vshrl.u32 %v701, 7
        %v703 = vsub.s32 1, %v702
        %v704 = vrot.slane %v695, %v703
        %v705 = vlaneseq
        %v706 = vshrl.u32 %v705, 7
        %v707 = vsub.s32 2, %v706
        %v708 = vrot.slane %v695, %v707
        %v709 = vlaneseq
        %v710 = vshrl.u32 %v709, 7
        %v711 = vsub.s32 3, %v710
        %v712 = vrot.slane %v695, %v711
        %v749 = vunpack.c.l.b16 %v663
        %v750 = vunpack.c.h.b16 %v663
        %v751 = vunpack.c.l.b16 %v664
        %v752 = vunpack.c.h.b16 %v664
        %v753 = vunpack.c.l.b16 %v665
        %v754 = vunpack.c.h.b16 %v665
        %v755 = vunpack.c.l.b16 %v666
        %v756 = vunpack.c.h.b16 %v666
        %v757 = vunpack.c.l.b16 %v667
        %v758 = vunpack.c.h.b16 %v667
        %v759 = vunpack.c.l.b16 %v668
        %v760 = vunpack.c.h.b16 %v668
        %v761 = vunpack.c.l.b16 %v669
        %v762 = vunpack.c.h.b16 %v669
        %v763 = vunpack.c.l.b16 %v670
        %v764 = vunpack.c.h.b16 %v670
        %v765 = vunpack.c.l.b16 %v671
        %v766 = vunpack.c.h.b16 %v671
        %v767 = vunpack.c.l.b16 %v672
        %v768 = vunpack.c.h.b16 %v672
        %v769 = vunpack.c.l.b16 %v673
        %v770 = vunpack.c.h.b16 %v673
        %v771 = vunpack.c.l.b16 %v674
        %v772 = vunpack.c.h.b16 %v674
        %v773 = vunpack.c.l.b16 %v675
        %v774 = vunpack.c.h.b16 %v675
        %v775 = vunpack.c.l.b16 %v676
        %v776 = vunpack.c.h.b16 %v676
        %v777 = vunpack.c.l.b16 %v677
        %v778 = vunpack.c.h.b16 %v677
        %v779 = vunpack.c.l.b16 %v678
        %v780 = vunpack.c.h.b16 %v678
        %v781 = vunpack.c.l.b16 %v679
        %v782 = vunpack.c.h.b16 %v679
        %v783 = vunpack.c.l.b16 %v680
        %v784 = vunpack.c.h.b16 %v680
        %v785 = vunpack.c.l.b16 %v681
        %v786 = vunpack.c.h.b16 %v681
        %v787 = vunpack.c.l.b16 %v682
        %v788 = vunpack.c.h.b16 %v682
        %v789 = vunpack.c.l.b16 %v683
        %v790 = vunpack.c.h.b16 %v683
        %v791 = vunpack.c.l.b16 %v684
        %v792 = vunpack.c.h.b16 %v684
        %v793 = vunpack.c.l.b16 %v685
        %v794 = vunpack.c.h.b16 %v685
        %v795 = vunpack.c.l.b16 %v686
        %v796 = vunpack.c.h.b16 %v686
        %v797 = vunpack.c.l.b16 %v687
        %v798 = vunpack.c.h.b16 %v687
        %v799 = vunpack.c.l.b16 %v688
        %v800 = vunpack.c.h.b16 %v688
        %v801 = vunpack.c.l.b16 %v689
        %v802 = vunpack.c.h.b16 %v689
        %v803 = vunpack.c.l.b16 %v690
        %v804 = vunpack.c.h.b16 %v690
        %v805 = vunpack.c.l.b16 %v691
        %v806 = vunpack.c.h.b16 %v691
        %v807 = vunpack.c.l.b16 %v692
        %v808 = vunpack.c.h.b16 %v692
        %v809 = vunpack.c.l.b16 %v693
        %v810 = vunpack.c.h.b16 %v693
        %v811 = vunpack.c.l.b16 %v694
        %v812 = vunpack.c.h.b16 %v694
        %v813 = vpack.c.b16 %v753, %v749
        %v814 = vpack.c.b16 %v754, %v750
        %v815 = vpack.c.b16 %v755, %v751
        %v816 = vpack.c.b16 %v756, %v752
        %v817 = vpack.c.b16 %v761, %v757
        %v818 = vpack.c.b16 %v762, %v758
        %v819 = vpack.c.b16 %v763, %v759
        %v820 = vpack.c.b16 %v764, %v760
        %v821 = vpack.c.b16 %v769, %v765
        %v822 = vpack.c.b16 %v770, %v766
        %v823 = vpack.c.b16 %v771, %v767
        %v824 = vpack.c.b16 %v772, %v768
        %v825 = vpack.c.b16 %v777, %v773
        %v826 = vpack.c.b16 %v778, %v774
        %v827 = vpack.c.b16 %v779, %v775
        %v828 = vpack.c.b16 %v780, %v776
        %v829 = vpack.c.b16 %v785, %v781
        %v830 = vpack.c.b16 %v786, %v782
        %v831 = vpack.c.b16 %v787, %v783
        %v832 = vpack.c.b16 %v788, %v784
        %v833 = vpack.c.b16 %v793, %v789
        %v834 = vpack.c.b16 %v794, %v790
        %v835 = vpack.c.b16 %v795, %v791
        %v836 = vpack.c.b16 %v796, %v792
        %v837 = vpack.c.b16 %v801, %v797
        %v838 = vpack.c.b16 %v802, %v798
        %v839 = vpack.c.b16 %v803, %v799
        %v840 = vpack.c.b16 %v804, %v800
        %v841 = vpack.c.b16 %v809, %v805
        %v842 = vpack.c.b16 %v810, %v806
        %v843 = vpack.c.b16 %v811, %v807
        %v844 = vpack.c.b16 %v812, %v808
        %877 = vmatprep.subr.bf16.mxu0 %v814
        %878 = vmatpush1.bf16.msra.mxu0 %v813
        %879 = vmatprep.subr.bf16.mxu0 %v818
        %880 = vmatpush1.bf16.msra.mxu0 %v817
        %881 = vmatprep.subr.bf16.mxu0 %v822
        %882 = vmatpush1.bf16.msra.mxu0 %v821
        %883 = vmatprep.subr.bf16.mxu0 %v826
        %884 = vmatpush1.bf16.msra.mxu0 %v825
        %885 = vmatprep.subr.bf16.mxu0 %v830
        %886 = vmatpush1.bf16.msra.mxu0 %v829
        %887 = vmatprep.subr.bf16.mxu0 %v834
        %888 = vmatpush1.bf16.msra.mxu0 %v833
        %889 = vmatprep.subr.bf16.mxu0 %v838
        %890 = vmatpush1.bf16.msra.mxu0 %v837
        %891 = vmatprep.subr.bf16.mxu0 %v842
        %892 = vmatpush1.bf16.msra.mxu0 %v841
        %893 = vmatprep.subr.bf16.mxu0 0
        %894 = vmatpush1.bf16.msra.mxu0 0
        %895 = vmatprep.subr.bf16.mxu0 0
        %896 = vmatpush1.bf16.msra.mxu0 0
        %897 = vmatprep.subr.bf16.mxu0 0
        %898 = vmatpush1.bf16.msra.mxu0 0
        %899 = vmatprep.subr.bf16.mxu0 0
        %900 = vmatpush1.bf16.msra.mxu0 0
        %901 = vmatprep.subr.bf16.mxu0 0
        %902 = vmatpush1.bf16.msra.mxu0 0
        %903 = vmatprep.subr.bf16.mxu0 0
        %904 = vmatpush1.bf16.msra.mxu0 0
        %905 = vmatprep.subr.bf16.mxu0 0
        %906 = vmatpush1.bf16.msra.mxu0 0
        %907 = vmatprep.subr.bf16.mxu0 0
        %908 = vmatpush1.bf16.msra.mxu0 0
        %909 = vmatprep.mubr.bf16.mxu0 0
        %910 = vmatmul.mubr.bf16.gmra.mrb[0].mxu0 %v661
        %v911 = vpop.f32.mrb[0].mxu0
        %v912 = vadd.f32 %v700, %v911
        %v913 = vpop.f32.mrb[0].mxu0
        %v914 = vadd.f32 %v704, %v913
        %v915 = vpop.f32.mrb[0].mxu0
        %v916 = vadd.f32 %v700, %v915
        %v917 = vpop.f32.mrb[0].mxu0
        %v918 = vadd.f32 %v704, %v917
        %919 = vmatprep.mubr.bf16.mxu0 0
        %920 = vmatmul.mubr.bf16.gmra.mrb[0].mxu0 %v662
        %v921 = vpop.f32.mrb[0].mxu0
        %v922 = vadd.f32 %v700, %v921
        %v923 = vpop.f32.mrb[0].mxu0
        %v924 = vadd.f32 %v704, %v923
        %v925 = vpop.f32.mrb[0].mxu0
        %v926 = vadd.f32 %v700, %v925
        %v927 = vpop.f32.mrb[0].mxu0
        %v928 = vadd.f32 %v704, %v927
        %929 = vdwg.mxu0
        %930 = vmatprep.subr.bf16.mxu0 %v816
        %931 = vmatpush1.bf16.msra.mxu0 %v815
        %932 = vmatprep.subr.bf16.mxu0 %v820
        %933 = vmatpush1.bf16.msra.mxu0 %v819
        %934 = vmatprep.subr.bf16.mxu0 %v824
        %935 = vmatpush1.bf16.msra.mxu0 %v823
        %936 = vmatprep.subr.bf16.mxu0 %v828
        %937 = vmatpush1.bf16.msra.mxu0 %v827
        %938 = vmatprep.subr.bf16.mxu0 %v832
        %939 = vmatpush1.bf16.msra.mxu0 %v831
        %940 = vmatprep.subr.bf16.mxu0 %v836
        %941 = vmatpush1.bf16.msra.mxu0 %v835
        %942 = vmatprep.subr.bf16.mxu0 %v840
        %943 = vmatpush1.bf16.msra.mxu0 %v839
        %944 = vmatprep.subr.bf16.mxu0 %v844
        %945 = vmatpush1.bf16.msra.mxu0 %v843
        %946 = vmatprep.subr.bf16.mxu0 0
        %947 = vmatpush1.bf16.msra.mxu0 0
        %948 = vmatprep.subr.bf16.mxu0 0
        %949 = vmatpush1.bf16.msra.mxu0 0
        %950 = vmatprep.subr.bf16.mxu0 0
        %951 = vmatpush1.bf16.msra.mxu0 0
        %952 = vmatprep.subr.bf16.mxu0 0
        %953 = vmatpush1.bf16.msra.mxu0 0
        %954 = vmatprep.subr.bf16.mxu0 0
        %955 = vmatpush1.bf16.msra.mxu0 0
        %956 = vmatprep.subr.bf16.mxu0 0
        %957 = vmatpush1.bf16.msra.mxu0 0
        %958 = vmatprep.subr.bf16.mxu0 0
        %959 = vmatpush1.bf16.msra.mxu0 0
        %960 = vmatprep.subr.bf16.mxu0 0
        %961 = vmatpush1.bf16.msra.mxu0 0
        %962 = vmatprep.mubr.bf16.mxu0 0
        %963 = vmatmul.mubr.bf16.gmra.mrb[0].mxu0 %v661
        %v964 = vpop.f32.mrb[0].mxu0
        %v965 = vadd.f32 %v708, %v964
        %v966 = vpop.f32.mrb[0].mxu0
        %v967 = vadd.f32 %v712, %v966
        %v968 = vpop.f32.mrb[0].mxu0
        %v969 = vadd.f32 %v708, %v968
        %v970 = vpop.f32.mrb[0].mxu0
        %v971 = vadd.f32 %v712, %v970
        %972 = vmatprep.mubr.bf16.mxu0 0
        %973 = vmatmul.mubr.bf16.gmra.mrb[0].mxu0 %v662
        %v974 = vpop.f32.mrb[0].mxu0
        %v975 = vadd.f32 %v708, %v974
        %v976 = vpop.f32.mrb[0].mxu0
        %v977 = vadd.f32 %v712, %v976
        %v978 = vpop.f32.mrb[0].mxu0
        %v979 = vadd.f32 %v708, %v978
        %v980 = vpop.f32.mrb[0].mxu0
        %v981 = vadd.f32 %v712, %v980
        %982 = vdwg.mxu0
        %v983 = vmul.f32 %v912, 0.5
        %v984 = vmul.f32 %v914, 0.5
        %v985 = vmul.f32 %v965, 0.5
        %v986 = vmul.f32 %v967, 0.5
        %v987 = vmul.f32 %v916, 0.5
        %v988 = vmul.f32 %v918, 0.5
        %v989 = vmul.f32 %v969, 0.5
        %v990 = vmul.f32 %v971, 0.5
        %v991 = vmul.f32 %v922, 0.5
        %v992 = vmul.f32 %v924, 0.5
        %v993 = vmul.f32 %v975, 0.5
        %v994 = vmul.f32 %v977, 0.5
        %v995 = vmul.f32 %v926, 0.5
        %v996 = vmul.f32 %v928, 0.5
        %v997 = vmul.f32 %v979, 0.5
        %v998 = vmul.f32 %v981, 0.5
        %v999 = vmul.f32 %v912, 0.70710677
        %v1000 = vmul.f32 %v914, 0.70710677
        %v1001 = vmul.f32 %v965, 0.70710677
        %v1002 = vmul.f32 %v967, 0.70710677
        %v1003 = vmul.f32 %v916, 0.70710677
        %v1004 = vmul.f32 %v918, 0.70710677
        %v1005 = vmul.f32 %v969, 0.70710677
        %v1006 = vmul.f32 %v971, 0.70710677
        %v1007 = vmul.f32 %v922, 0.70710677
        %v1008 = vmul.f32 %v924, 0.70710677
        %v1009 = vmul.f32 %v975, 0.70710677
        %v1010 = vmul.f32 %v977, 0.70710677
        %v1011 = vmul.f32 %v926, 0.70710677
        %v1012 = vmul.f32 %v928, 0.70710677
        %v1013 = vmul.f32 %v979, 0.70710677
        %v1014 = vmul.f32 %v981, 0.70710677
        %v1015 = verf.f32.pop %v999
        %v1016 = verf.f32.pop %v1000
        %v1017 = verf.f32.pop %v1001
        %v1018 = verf.f32.pop %v1002
        %v1019 = verf.f32.pop %v1003
        %v1020 = verf.f32.pop %v1004
        %v1021 = verf.f32.pop %v1005
        %v1022 = verf.f32.pop %v1006
        %v1023 = verf.f32.pop %v1007
        %v1024 = verf.f32.pop %v1008
        %v1025 = verf.f32.pop %v1009
        %v1026 = verf.f32.pop %v1010
        %v1027 = verf.f32.pop %v1011
        %v1028 = verf.f32.pop %v1012
        %v1029 = verf.f32.pop %v1013
        %v1030 = verf.f32.pop %v1014
        %v1031 = vadd.f32 %v1015, 1.0
        %v1032 = vadd.f32 %v1016, 1.0
        %v1033 = vadd.f32 %v1017, 1.0
        %v1034 = vadd.f32 %v1018, 1.0
        %v1035 = vadd.f32 %v1019, 1.0
        %v1036 = vadd.f32 %v1020, 1.0
        %v1037 = vadd.f32 %v1021, 1.0
        %v1038 = vadd.f32 %v1022, 1.0
        %v1039 = vadd.f32 %v1023, 1.0
        %v1040 = vadd.f32 %v1024, 1.0
        %v1041 = vadd.f32 %v1025, 1.0
        %v1042 = vadd.f32 %v1026, 1.0
        %v1043 = vadd.f32 %v1027, 1.0
        %v1044 = vadd.f32 %v1028, 1.0
        %v1045 = vadd.f32 %v1029, 1.0
        %v1046 = vadd.f32 %v1030, 1.0
        %v1047 = vmul.f32 %v983, %v1031
        %v1048 = vmul.f32 %v984, %v1032
        %v1049 = vmul.f32 %v985, %v1033
        %v1050 = vmul.f32 %v986, %v1034
        %v1051 = vmul.f32 %v987, %v1035
        %v1052 = vmul.f32 %v988, %v1036
        %v1053 = vmul.f32 %v989, %v1037
        %v1054 = vmul.f32 %v990, %v1038
        %v1055 = vmul.f32 %v991, %v1039
        %v1056 = vmul.f32 %v992, %v1040
        %v1057 = vmul.f32 %v993, %v1041
        %v1058 = vmul.f32 %v994, %v1042
        %v1059 = vmul.f32 %v995, %v1043
        %v1060 = vmul.f32 %v996, %v1044
        %v1061 = vmul.f32 %v997, %v1045
        %v1062 = vmul.f32 %v998, %v1046
        %v1063 = vld [vmem:[#allocation3] sm:$0xff]
        %v1064 = vld [vmem:[#allocation3 + $0x8] sm:$0xff]
        %v1065 = vld [vmem:[#allocation3 + $0x10] sm:$0xff]
        %v1066 = vld [vmem:[#allocation3 + $0x18] sm:$0xff]
        %v1067 = vpack.c.bf16 %v1051, %v1047
        %v1068 = vpack.c.bf16 %v1052, %v1048
        %v1069 = vpack.c.bf16 %v1053, %v1049
        %v1070 = vpack.c.bf16 %v1054, %v1050
        %v1071 = vpack.c.bf16 %v1059, %v1055
        %v1072 = vpack.c.bf16 %v1060, %v1056
        %v1073 = vpack.c.bf16 %v1061, %v1057
        %v1074 = vpack.c.bf16 %v1062, %v1058
        %v1075 = vld [vmem:[#allocation12] sm:$0xf]
        %v1076 = vld [vmem:[#allocation12 + $0x4] sm:$0xf]
        %v1077 = vld [vmem:[#allocation12 + $0x8] sm:$0xf]
        %v1078 = vld [vmem:[#allocation12 + $0xc] sm:$0xf]
        %v1079 = vld [vmem:[#allocation12 + $0x10] sm:$0xf]
        %v1080 = vld [vmem:[#allocation12 + $0x14] sm:$0xf]
        %v1081 = vld [vmem:[#allocation12 + $0x18] sm:$0xf]
        %v1082 = vld [vmem:[#allocation12 + $0x1c] sm:$0xf]
        %v1083 = vld [vmem:[#allocation12 + $0x20] sm:$0xf]
        %v1084 = vld [vmem:[#allocation12 + $0x24] sm:$0xf]
        %v1085 = vld [vmem:[#allocation12 + $0x28] sm:$0xf]
        %v1086 = vld [vmem:[#allocation12 + $0x2c] sm:$0xf]
        %v1087 = vld [vmem:[#allocation12 + $0x30] sm:$0xf]
        %v1088 = vld [vmem:[#allocation12 + $0x34] sm:$0xf]
        %v1089 = vld [vmem:[#allocation12 + $0x38] sm:$0xf]
        %v1090 = vld [vmem:[#allocation12 + $0x3c] sm:$0xf]
        %v1091 = vld [vmem:[#allocation12 + $0x40] sm:$0xf]
        %v1092 = vld [vmem:[#allocation12 + $0x44] sm:$0xf]
        %v1093 = vld [vmem:[#allocation12 + $0x48] sm:$0xf]
        %v1094 = vld [vmem:[#allocation12 + $0x4c] sm:$0xf]
        %v1095 = vld [vmem:[#allocation12 + $0x50] sm:$0xf]
        %v1096 = vld [vmem:[#allocation12 + $0x54] sm:$0xf]
        %v1097 = vld [vmem:[#allocation12 + $0x58] sm:$0xf]
        %v1098 = vld [vmem:[#allocation12 + $0x5c] sm:$0xf]
        %v1099 = vld [vmem:[#allocation12 + $0x60] sm:$0xf]
        %v1100 = vld [vmem:[#allocation12 + $0x64] sm:$0xf]
        %v1101 = vld [vmem:[#allocation12 + $0x68] sm:$0xf]
        %v1102 = vld [vmem:[#allocation12 + $0x6c] sm:$0xf]
        %v1103 = vld [vmem:[#allocation12 + $0x70] sm:$0xf]
        %v1104 = vld [vmem:[#allocation12 + $0x74] sm:$0xf]
        %v1105 = vld [vmem:[#allocation12 + $0x78] sm:$0xf]
        %v1106 = vld [vmem:[#allocation12 + $0x7c] sm:$0xf]
        %v1107 = vld [vmem:[#allocation12 + $0x80] sm:$0xf]
        %v1108 = vld [vmem:[#allocation12 + $0x84] sm:$0xf]
        %v1109 = vld [vmem:[#allocation12 + $0x88] sm:$0xf]
        %v1110 = vld [vmem:[#allocation12 + $0x8c] sm:$0xf]
        %v1111 = vld [vmem:[#allocation12 + $0x90] sm:$0xf]
        %v1112 = vld [vmem:[#allocation12 + $0x94] sm:$0xf]
        %v1113 = vld [vmem:[#allocation12 + $0x98] sm:$0xf]
        %v1114 = vld [vmem:[#allocation12 + $0x9c] sm:$0xf]
        %v1115 = vld [vmem:[#allocation12 + $0xa0] sm:$0xf]
        %v1116 = vld [vmem:[#allocation12 + $0xa4] sm:$0xf]
        %v1117 = vld [vmem:[#allocation12 + $0xa8] sm:$0xf]
        %v1118 = vld [vmem:[#allocation12 + $0xac] sm:$0xf]
        %v1119 = vld [vmem:[#allocation12 + $0xb0] sm:$0xf]
        %v1120 = vld [vmem:[#allocation12 + $0xb4] sm:$0xf]
        %v1121 = vld [vmem:[#allocation12 + $0xb8] sm:$0xf]
        %v1122 = vld [vmem:[#allocation12 + $0xbc] sm:$0xf]
        %v1123 = vld [vmem:[#allocation12 + $0xc0] sm:$0xf]
        %v1124 = vld [vmem:[#allocation12 + $0xc4] sm:$0xf]
        %v1125 = vld [vmem:[#allocation12 + $0xc8] sm:$0xf]
        %v1126 = vld [vmem:[#allocation12 + $0xcc] sm:$0xf]
        %v1127 = vld [vmem:[#allocation12 + $0xd0] sm:$0xf]
        %v1128 = vld [vmem:[#allocation12 + $0xd4] sm:$0xf]
        %v1129 = vld [vmem:[#allocation12 + $0xd8] sm:$0xf]
        %v1130 = vld [vmem:[#allocation12 + $0xdc] sm:$0xf]
        %v1131 = vld [vmem:[#allocation12 + $0xe0] sm:$0xf]
        %v1132 = vld [vmem:[#allocation12 + $0xe4] sm:$0xf]
        %v1133 = vld [vmem:[#allocation12 + $0xe8] sm:$0xf]
        %v1134 = vld [vmem:[#allocation12 + $0xec] sm:$0xf]
        %v1135 = vld [vmem:[#allocation12 + $0xf0] sm:$0xf]
        %v1136 = vld [vmem:[#allocation12 + $0xf4] sm:$0xf]
        %v1137 = vld [vmem:[#allocation12 + $0xf8] sm:$0xf]
        %v1138 = vld [vmem:[#allocation12 + $0xfc] sm:$0xf]
        %v1203 = vunpack.c.l.b16 %v1075
        %v1204 = vunpack.c.l.b16 %v1076
        %v1205 = vunpack.c.l.b16 %v1077
        %v1206 = vunpack.c.l.b16 %v1078
        %v1207 = vunpack.c.l.b16 %v1079
        %v1208 = vunpack.c.l.b16 %v1080
        %v1209 = vunpack.c.l.b16 %v1081
        %v1210 = vunpack.c.l.b16 %v1082
        %v1211 = vunpack.c.l.b16 %v1083
        %v1212 = vunpack.c.l.b16 %v1084
        %v1213 = vunpack.c.l.b16 %v1085
        %v1214 = vunpack.c.l.b16 %v1086
        %v1215 = vunpack.c.l.b16 %v1087
        %v1216 = vunpack.c.l.b16 %v1088
        %v1217 = vunpack.c.l.b16 %v1089
        %v1218 = vunpack.c.l.b16 %v1090
        %v1219 = vunpack.c.l.b16 %v1091
        %v1220 = vunpack.c.l.b16 %v1092
        %v1221 = vunpack.c.l.b16 %v1093
        %v1222 = vunpack.c.l.b16 %v1094
        %v1223 = vunpack.c.l.b16 %v1095
        %v1224 = vunpack.c.l.b16 %v1096
        %v1225 = vunpack.c.l.b16 %v1097
        %v1226 = vunpack.c.l.b16 %v1098
        %v1227 = vunpack.c.l.b16 %v1099
        %v1228 = vunpack.c.l.b16 %v1100
        %v1229 = vunpack.c.l.b16 %v1101
        %v1230 = vunpack.c.l.b16 %v1102
        %v1231 = vunpack.c.l.b16 %v1103
        %v1232 = vunpack.c.l.b16 %v1104
        %v1233 = vunpack.c.l.b16 %v1105
        %v1234 = vunpack.c.l.b16 %v1106
        %v1235 = vunpack.c.l.b16 %v1107
        %v1236 = vunpack.c.l.b16 %v1108
        %v1237 = vunpack.c.l.b16 %v1109
        %v1238 = vunpack.c.l.b16 %v1110
        %v1239 = vunpack.c.l.b16 %v1111
        %v1240 = vunpack.c.l.b16 %v1112
        %v1241 = vunpack.c.l.b16 %v1113
        %v1242 = vunpack.c.l.b16 %v1114
        %v1243 = vunpack.c.l.b16 %v1115
        %v1244 = vunpack.c.l.b16 %v1116
        %v1245 = vunpack.c.l.b16 %v1117
        %v1246 = vunpack.c.l.b16 %v1118
        %v1247 = vunpack.c.l.b16 %v1119
        %v1248 = vunpack.c.l.b16 %v1120
        %v1249 = vunpack.c.l.b16 %v1121
        %v1250 = vunpack.c.l.b16 %v1122
        %v1251 = vunpack.c.l.b16 %v1123
        %v1252 = vunpack.c.l.b16 %v1124
        %v1253 = vunpack.c.l.b16 %v1125
        %v1254 = vunpack.c.l.b16 %v1126
        %v1255 = vunpack.c.l.b16 %v1127
        %v1256 = vunpack.c.l.b16 %v1128
        %v1257 = vunpack.c.l.b16 %v1129
        %v1258 = vunpack.c.l.b16 %v1130
        %v1259 = vunpack.c.l.b16 %v1131
        %v1260 = vunpack.c.l.b16 %v1132
        %v1261 = vunpack.c.l.b16 %v1133
        %v1262 = vunpack.c.l.b16 %v1134
        %v1263 = vunpack.c.l.b16 %v1135
        %v1264 = vunpack.c.l.b16 %v1136
        %v1265 = vunpack.c.l.b16 %v1137
        %v1266 = vunpack.c.l.b16 %v1138
        %v1267 = vpack.c.b16 %v1204, %v1203
        %v1268 = vpack.c.b16 %v1206, %v1205
        %v1269 = vpack.c.b16 %v1208, %v1207
        %v1270 = vpack.c.b16 %v1210, %v1209
        %v1271 = vpack.c.b16 %v1212, %v1211
        %v1272 = vpack.c.b16 %v1214, %v1213
        %v1273 = vpack.c.b16 %v1216, %v1215
        %v1274 = vpack.c.b16 %v1218, %v1217
        %v1275 = vpack.c.b16 %v1220, %v1219
        %v1276 = vpack.c.b16 %v1222, %v1221
        %v1277 = vpack.c.b16 %v1224, %v1223
        %v1278 = vpack.c.b16 %v1226, %v1225
        %v1279 = vpack.c.b16 %v1228, %v1227
        %v1280 = vpack.c.b16 %v1230, %v1229
        %v1281 = vpack.c.b16 %v1232, %v1231
        %v1282 = vpack.c.b16 %v1234, %v1233
        %v1283 = vpack.c.b16 %v1236, %v1235
        %v1284 = vpack.c.b16 %v1238, %v1237
        %v1285 = vpack.c.b16 %v1240, %v1239
        %v1286 = vpack.c.b16 %v1242, %v1241
        %v1287 = vpack.c.b16 %v1244, %v1243
        %v1288 = vpack.c.b16 %v1246, %v1245
        %v1289 = vpack.c.b16 %v1248, %v1247
        %v1290 = vpack.c.b16 %v1250, %v1249
        %v1291 = vpack.c.b16 %v1252, %v1251
        %v1292 = vpack.c.b16 %v1254, %v1253
        %v1293 = vpack.c.b16 %v1256, %v1255
        %v1294 = vpack.c.b16 %v1258, %v1257
        %v1295 = vpack.c.b16 %v1260, %v1259
        %v1296 = vpack.c.b16 %v1262, %v1261
        %v1297 = vpack.c.b16 %v1264, %v1263
        %v1298 = vpack.c.b16 %v1266, %v1265
        %1331 = vmatprep.subr.bf16.mxu0 0
        %1332 = vmatpush1.bf16.msra.mxu0 %v1267
        %1333 = vmatprep.subr.bf16.mxu0 0
        %1334 = vmatpush1.bf16.msra.mxu0 %v1268
        %1335 = vmatprep.subr.bf16.mxu0 0
        %1336 = vmatpush1.bf16.msra.mxu0 %v1269
        %1337 = vmatprep.subr.bf16.mxu0 0
        %1338 = vmatpush1.bf16.msra.mxu0 %v1270
        %1339 = vmatprep.subr.bf16.mxu0 0
        %1340 = vmatpush1.bf16.msra.mxu0 %v1271
        %1341 = vmatprep.subr.bf16.mxu0 0
        %1342 = vmatpush1.bf16.msra.mxu0 %v1272
        %1343 = vmatprep.subr.bf16.mxu0 0
        %1344 = vmatpush1.bf16.msra.mxu0 %v1273
        %1345 = vmatprep.subr.bf16.mxu0 0
        %1346 = vmatpush1.bf16.msra.mxu0 %v1274
        %1347 = vmatprep.subr.bf16.mxu0 0
        %1348 = vmatpush1.bf16.msra.mxu0 %v1275
        %1349 = vmatprep.subr.bf16.mxu0 0
        %1350 = vmatpush1.bf16.msra.mxu0 %v1276
        %1351 = vmatprep.subr.bf16.mxu0 0
        %1352 = vmatpush1.bf16.msra.mxu0 %v1277
        %1353 = vmatprep.subr.bf16.mxu0 0
        %1354 = vmatpush1.bf16.msra.mxu0 %v1278
        %1355 = vmatprep.subr.bf16.mxu0 0
        %1356 = vmatpush1.bf16.msra.mxu0 %v1279
        %1357 = vmatprep.subr.bf16.mxu0 0
        %1358 = vmatpush1.bf16.msra.mxu0 %v1280
        %1359 = vmatprep.subr.bf16.mxu0 0
        %1360 = vmatpush1.bf16.msra.mxu0 %v1281
        %1361 = vmatprep.subr.bf16.mxu0 0
        %1362 = vmatpush1.bf16.msra.mxu0 %v1282
        %1363 = vmatprep.mubr.bf16.mxu0 %v1068
        %1364 = vmatmul.mubr.bf16.gmra.mrb[0].mxu0 %v1067
        %v1365 = vpop.f32.mrb[0].mxu0
        %v1366 = vadd.f32 0.0, %v1365
        %v1367 = vpop.f32.mrb[0].mxu0
        %v1368 = vpop.f32.mrb[0].mxu0
        %v1369 = vadd.f32 0.0, %v1368
        %v1370 = vpop.f32.mrb[0].mxu0
        %1371 = vmatprep.mubr.bf16.mxu0 %v1072
        %1372 = vmatmul.mubr.bf16.gmra.mrb[0].mxu0 %v1071
        %v1373 = vpop.f32.mrb[0].mxu0
        %v1374 = vadd.f32 0.0, %v1373
        %v1375 = vpop.f32.mrb[0].mxu0
        %v1376 = vpop.f32.mrb[0].mxu0
        %v1377 = vadd.f32 0.0, %v1376
        %v1378 = vpop.f32.mrb[0].mxu0
        %1379 = vdwg.mxu0
        %1380 = vmatprep.subr.bf16.mxu0 0
        %1381 = vmatpush1.bf16.msra.mxu0 %v1283
        %1382 = vmatprep.subr.bf16.mxu0 0
        %1383 = vmatpush1.bf16.msra.mxu0 %v1284
        %1384 = vmatprep.subr.bf16.mxu0 0
        %1385 = vmatpush1.bf16.msra.mxu0 %v1285
        %1386 = vmatprep.subr.bf16.mxu0 0
        %1387 = vmatpush1.bf16.msra.mxu0 %v1286
        %1388 = vmatprep.subr.bf16.mxu0 0
        %1389 = vmatpush1.bf16.msra.mxu0 %v1287
        %1390 = vmatprep.subr.bf16.mxu0 0
        %1391 = vmatpush1.bf16.msra.mxu0 %v1288
        %1392 = vmatprep.subr.bf16.mxu0 0
        %1393 = vmatpush1.bf16.msra.mxu0 %v1289
        %1394 = vmatprep.subr.bf16.mxu0 0
        %1395 = vmatpush1.bf16.msra.mxu0 %v1290
        %1396 = vmatprep.subr.bf16.mxu0 0
        %1397 = vmatpush1.bf16.msra.mxu0 %v1291
        %1398 = vmatprep.subr.bf16.mxu0 0
        %1399 = vmatpush1.bf16.msra.mxu0 %v1292
        %1400 = vmatprep.subr.bf16.mxu0 0
        %1401 = vmatpush1.bf16.msra.mxu0 %v1293
        %1402 = vmatprep.subr.bf16.mxu0 0
        %1403 = vmatpush1.bf16.msra.mxu0 %v1294
        %1404 = vmatprep.subr.bf16.mxu0 0
        %1405 = vmatpush1.bf16.msra.mxu0 %v1295
        %1406 = vmatprep.subr.bf16.mxu0 0
        %1407 = vmatpush1.bf16.msra.mxu0 %v1296
        %1408 = vmatprep.subr.bf16.mxu0 0
        %1409 = vmatpush1.bf16.msra.mxu0 %v1297
        %1410 = vmatprep.subr.bf16.mxu0 0
        %1411 = vmatpush1.bf16.msra.mxu0 %v1298
        %1412 = vmatprep.mubr.bf16.mxu0 %v1070
        %1413 = vmatmul.mubr.bf16.gmra.mrb[0].mxu0 %v1069
        %v1414 = vpop.f32.mrb[0].mxu0
        %v1415 = vadd.f32 %v1366, %v1414
        %v1416 = vpop.f32.mrb[0].mxu0
        %v1417 = vpop.f32.mrb[0].mxu0
        %v1418 = vadd.f32 %v1369, %v1417
        %v1419 = vpop.f32.mrb[0].mxu0
        %1420 = vmatprep.mubr.bf16.mxu0 %v1074
        %1421 = vmatmul.mubr.bf16.gmra.mrb[0].mxu0 %v1073
        %v1422 = vpop.f32.mrb[0].mxu0
        %v1423 = vadd.f32 %v1374, %v1422
        %v1424 = vpop.f32.mrb[0].mxu0
        %v1425 = vpop.f32.mrb[0].mxu0
        %v1426 = vadd.f32 %v1377, %v1425
        %v1427 = vpop.f32.mrb[0].mxu0
        %1428 = vdwg.mxu0
        %v1429 = vadd.f32 %v1063, %v1415
        %v1430 = vadd.f32 %v1064, %v1418
        %v1431 = vadd.f32 %v1065, %v1423
        %v1432 = vadd.f32 %v1066, %v1426
        %1433 = vst [vmem:[#allocation3] sm:$0xff] %v1429
        %1434 = vst [vmem:[#allocation3 + $0x8] sm:$0xff] %v1430
        %1435 = vst [vmem:[#allocation3 + $0x10] sm:$0xff] %v1431
        %1436 = vst [vmem:[#allocation3 + $0x18] sm:$0xff] %v1432
        // Predicated region
        $region73: #{transformer_block.1} parent=43 // pred_check
          %p1437 = pneg %p402
        $region74: #{transformer_block.1} parent=43 // pred_check_branch
          %1439 = sbr.rel (%p1437) target = $region76
        $region75: #{transformer_block.1} parent=43 // pred_region
          %v1440 = vld [vmem:[#allocation13] sm:$0x1f]
          %v1441 = vld [vmem:[#allocation3] sm:$0xff]
          %v1442 = vld [vmem:[#allocation3 + $0x8] sm:$0xff]
          %v1443 = vld [vmem:[#allocation3 + $0x10] sm:$0xff]
          %v1444 = vld [vmem:[#allocation3 + $0x18] sm:$0xff]
          %1445 = vadd.xlane.f32.xlu0 %v1441
          %v1446 = vpop.xlane.xlu0 %1445
          %1447 = vadd.xlane.f32.xlu0 %v1442
          %v1448 = vpop.xlane.xlu0 %1447
          %1449 = vadd.xlane.f32.xlu0 %v1443
          %v1450 = vpop.xlane.xlu0 %1449
          %1451 = vadd.xlane.f32.xlu0 %v1444
          %v1452 = vpop.xlane.xlu0 %1451
          %v1453 = vrcp.pop 128.0
          %v1454 = vmul.f32 %v1446, %v1453
          %v1455 = vmul.f32 %v1448, %v1453
          %v1456 = vmul.f32 %v1450, %v1453
          %v1457 = vmul.f32 %v1452, %v1453
          %v1458 = vsub.f32 %v1441, %v1454
          %v1459 = vsub.f32 %v1442, %v1455
          %v1460 = vsub.f32 %v1443, %v1456
          %v1461 = vsub.f32 %v1444, %v1457
          %v1462 = vmul.f32 %v1458, %v1458
          %v1463 = vmul.f32 %v1459, %v1459
          %v1464 = vmul.f32 %v1460, %v1460
          %v1465 = vmul.f32 %v1461, %v1461
          %1466 = vadd.xlane.f32.xlu0 %v1462
          %v1467 = vpop.xlane.xlu0 %1466
          %1468 = vadd.xlane.f32.xlu0 %v1463
          %v1469 = vpop.xlane.xlu0 %1468
          %1470 = vadd.xlane.f32.xlu0 %v1464
          %v1471 = vpop.xlane.xlu0 %1470
          %1472 = vadd.xlane.f32.xlu0 %v1465
          %v1473 = vpop.xlane.xlu0 %1472
          %v1474 = vmul.f32 %v1467, %v1453
          %v1475 = vmul.f32 %v1469, %v1453
          %v1476 = vmul.f32 %v1471, %v1453
          %v1477 = vmul.f32 %v1473, %v1453
          %v1478 = vadd.f32 %v1474, 1e-05
          %v1479 = vadd.f32 %v1475, 1e-05
          %v1480 = vadd.f32 %v1476, 1e-05
          %v1481 = vadd.f32 %v1477, 1e-05
          %v1482 = vrsqrt.pop %v1478
          %v1483 = vrsqrt.pop %v1479
          %v1484 = vrsqrt.pop %v1480
          %v1485 = vrsqrt.pop %v1481
          %v1486 = vmul.f32 %v1458, %v1482
          %v1487 = vmul.f32 %v1459, %v1483
          %v1488 = vmul.f32 %v1460, %v1484
          %v1489 = vmul.f32 %v1461, %v1485
          %v1490 = vlaneseq
          %v1491 = vshrl.u32 %v1490, 7
          %v1492 = vsub.s32 3, %v1491
          %v1493 = vrot.slane %v1440, %v1492
          %v1494 = vmul.f32 %v1486, %v1493
          %v1495 = vmul.f32 %v1487, %v1493
          %v1496 = vmul.f32 %v1488, %v1493
          %v1497 = vmul.f32 %v1489, %v1493
          %v1498 = vlaneseq
          %v1499 = vshrl.u32 %v1498, 7
          %v1500 = vsub.s32 4, %v1499
          %v1501 = vrot.slane %v1440, %v1500
          %v1502 = vadd.f32 %v1494, %v1501
          %v1503 = vadd.f32 %v1495, %v1501
          %v1504 = vadd.f32 %v1496, %v1501
          %v1505 = vadd.f32 %v1497, %v1501
          %1506 = vst [vmem:[%s395] sm:$0xff] %v1502
          %1507 = vst [vmem:[%s395 + $0x8] sm:$0xff] %v1503
          %1508 = vst [vmem:[%s395 + $0x10] sm:$0xff] %v1504
          %1509 = vst [vmem:[%s395 + $0x18] sm:$0xff] %v1505
        $region76: #{transformer_block.1} parent=43 // pred_fallthru
          _
        %s1510 = sand.u32 %s208, 1
        %s1511 = scalar_lea.sflag [#allocation6], %s1510
        %s1512 = sand.u32 %s208, 1
        %s1513 = smul.addr %s1512, 32
        %s1514 = scalar_lea.vmem [#allocation15], %s1513
        // Predicated region
        $region77: #{transformer_block.1} parent=43 // pred_check
          %p1515 = pneg %p218
        $region78: #{transformer_block.1} parent=43 // pred_check_branch
          %1517 = sbr.rel (%p1515) target = $region80
        $region79: #{transformer_block.1} parent=43 // pred_region
          %s1518 = smul.u32 4, %s32
          %s1520 = ssub.s32 512, 512
          %1521 = vsyncadd %s1511, %s1520
          %s1522 = smul.addr %s31, 4
          %s1523 = sadd.s32 %s1518, %s1522
          %s1524 = smul.addr %s1523, 128
          %s1525 = scalar_lea.hbm %s6, %s1524
          %s1526 = sshll.u32 %s1514, 4
          %s1527 = int_to_ptr.vmem [resolvable:$true] %s1526
          %1532 = dma.vmem_to_hbm [thread:$0]  %s1527, 512, %s1525, %s1511, 128, 128, 8
        $region80: #{transformer_block.1} parent=43 // pred_fallthru
          _
      $region44: #{transformer_block.1} parent=5 // pred_fallthru
        _
      %p1533 = scmp.le.s32.totalorder 2, %s21
      // Predicated region
      $region81: #{transformer_block.1} parent=5 // pred_check
        %p1534 = pneg %p1533
      $region82: #{transformer_block.1} parent=5 // pred_check_branch
        %1536 = sbr.rel (%p1534) target = $region84
      $region83: #{transformer_block.1} parent=5 // pred_region
        %s1537 = ssub.s32 %s21, 2
        // Predicated region
        $region85: #{transformer_block.1} parent=83 // pred_check
          %p1538 = pneg %p224
        $region86: #{transformer_block.1} parent=83 // pred_check_branch
          %1540 = sbr.rel (%p1538) target = $region88
        $region87: #{transformer_block.1} parent=83 // pred_region
          %s1541 = sand.u32 %s209, 1
          %s1542 = scalar_lea.sflag [#allocation6], %s1541
          %s1543 = sand.u32 %s209, 1
          %s1544 = smul.addr %s1543, 32
          %s1545 = scalar_lea.vmem [#allocation15], %s1544
          %1546 = dma.done %s1542, 512
        $region88: #{transformer_block.1} parent=83 // pred_fallthru
          _
      $region84: #{transformer_block.1} parent=5 // pred_fallthru
        _
    $region6: #{transformer_block.1} parent=1 // loop_footer
      %s25 = sadd.s32 1, %s21
    $region7: #{transformer_block.1} parent=1 // loop_footer_branch
      %20 = sbr.rel target = $region3
    $region8: #{transformer_block.1} parent=1 // loop_exit
      _
    %1547 = vsyncpa [#allocation5], 1
    %s1548 = scalar_lea.sflag [#allocation5], 1
    %1549 = vsyncpa %s1548, 1
    %1550 = vsyncpa [#allocation8], 1
    %1551 = vsyncpa [#allocation11], 1
    %1552 = vsyncpa [#allocation14], 1
    %1553 = vsyncpa [#allocation6], 1
    %s1554 = scalar_lea.sflag [#allocation6], 1
    %1555 = vsyncpa %s1554, 1

</llo_original>
